<compile_context>
chip_gen: v6e
topology: v6e:2x2x1
jax: 0.10.0
libtpu: 0.0.40
codegen_flags: <defaults>
</compile_context>

<pallas_src>
import functools
import math

import jax
import jax.numpy as jnp
from jax.experimental import pallas as pl
from jax.experimental.pallas import tpu as pltpu


# ----------------------------- helpers -----------------------------

def _round_up(x, m):
    return ((x + m - 1) // m) * m


def _gelu_tanh(y):
    # TODO(synk): HF BLIP uses exact (erf) GELU; tanh approximation is used to
    # stay on guaranteed-lowerable elementwise ops (differs at ~1e-3).
    c = 0.7978845608028654  # sqrt(2/pi)
    return 0.5 * y * (1.0 + jnp.tanh(c * (y + 0.044715 * y * y * y)))


def _layernorm(x, g, b, eps):
    mean = jnp.mean(x, axis=-1, keepdims=True)
    var = jnp.mean((x - mean) * (x - mean), axis=-1, keepdims=True)
    return (x - mean) * jax.lax.rsqrt(var + eps) * g + b


# ----------------------------- Pallas kernels -----------------------------

def _patch_embed_kernel(x_ref, w_ref, b_ref, pos_ref, o_ref):
    # x_ref: [1, Np, Cpp]; out: [1, Np, D] = patches @ W + b + pos[1:]
    x = x_ref[0]
    emb = jnp.dot(x, w_ref[...], preferred_element_type=jnp.float32)
    o_ref[0] = emb + b_ref[...] + pos_ref[...]


def _encoder_layer_kernel(h_ref, ln1_g_ref, ln1_b_ref, wqkv_ref, bqkv_ref,
                          wo_ref, bo_ref, ln2_g_ref, ln2_b_ref,
                          w1_ref, b1_ref, w2_ref, b2_ref, o_ref,
                          *, hidden, num_heads, head_dim, eps):
    D, nh, dh = hidden, num_heads, head_dim
    h_in = h_ref[0]                                   # [S, D] residual stream
    S = h_in.shape[0]

    # ---- LN1 fused with the QKV matmul ----
    hn = _layernorm(h_in, ln1_g_ref[...], ln1_b_ref[...], eps)

    # ---- fused QKV projection (scale folded into the Q columns at init;
    #      weight width padded to a lane-dense multiple of 128) ----
    qkv = jnp.dot(hn, wqkv_ref[...],
                  preferred_element_type=jnp.float32) + bqkv_ref[...]

    # ---- multi-head attention + output projection, heads unrolled in-kernel
    #      (no XLA-level head split/merge transposes) ----
    wo = wo_ref[...]
    attn = jnp.zeros((S, D), jnp.float32)
    for hidx in range(nh):
        qh = qkv[:, hidx * dh:(hidx + 1) * dh]              # already scaled
        kh = qkv[:, D + hidx * dh:D + (hidx + 1) * dh]
        vh = qkv[:, 2 * D + hidx * dh:2 * D + (hidx + 1) * dh]
        s = jnp.dot(qh, kh.T, preferred_element_type=jnp.float32)
        s = s - jnp.max(s, axis=-1, keepdims=True)
        p = jnp.exp(s)
        p = p / jnp.sum(p, axis=-1, keepdims=True)
        ah = jnp.dot(p, vh, preferred_element_type=jnp.float32)     # [S, dh]
        # concat over heads @ Wo  ==  sum over heads of ah @ Wo[rows of head]
        attn = attn + jnp.dot(ah, wo[hidx * dh:(hidx + 1) * dh, :],
                              preferred_element_type=jnp.float32)

    h1 = h_in + attn + bo_ref[...]

    # ---- LN2 fused with the MLP (padded hidden; zero pads contribute 0) ----
    hn2 = _layernorm(h1, ln2_g_ref[...], ln2_b_ref[...], eps)
    m = jnp.dot(hn2, w1_ref[...],
                preferred_element_type=jnp.float32) + b1_ref[...]
    m = _gelu_tanh(m)
    o_ref[0] = h1 + jnp.dot(m, w2_ref[...],
                            preferred_element_type=jnp.float32) + b2_ref[...]


def _head_kernel(x_ref, g_ref, b_ref, w_ref, o_ref, *, eps):
    # post-LN on pooled CLS rows fused with the (bias-free) visual projection.
    ln = _layernorm(x_ref[...], g_ref[...], b_ref[...], eps)
    o_ref[...] = jnp.dot(ln, w_ref[...], preferred_element_type=jnp.float32)


# ----------------------------- Pallas wrappers -----------------------------

def patch_embed(patches, w, b, pos_patch):
    """patches: [B, Np, Cpp] -> [B, Np, D] (conv-as-matmul + bias + pos)."""
    B, Np, Cpp = patches.shape
    D = w.shape[1]
    return pl.pallas_call(
        _patch_embed_kernel,
        out_shape=jax.ShapeDtypeStruct((B, Np, D), jnp.float32),
        grid=(B,),
        in_specs=[
            pl.BlockSpec((1, Np, Cpp), lambda i: (i, 0, 0)),
            pl.BlockSpec((Cpp, D), lambda i: (0, 0)),
            pl.BlockSpec((1, D), lambda i: (0, 0)),
            pl.BlockSpec((Np, D), lambda i: (0, 0)),
        ],
        out_specs=pl.BlockSpec((1, Np, D), lambda i: (i, 0, 0)),
        compiler_params=pltpu.CompilerParams(
            dimension_semantics=("parallel",)),
    )(patches, w, b, pos_patch)


def encoder_layer(h, lyr, cfg):
    """One fused transformer encoder layer: [B, S, D] -> [B, S, D]."""
    B, S, D = h.shape
    nh = cfg.heads
    dh = D // nh
    qkv_w = lyr["wqkv"].shape[1]
    mlp_w = lyr["w1"].shape[1]

    kernel = functools.partial(_encoder_layer_kernel, hidden=D, num_heads=nh,
                               head_dim=dh, eps=cfg.eps)
    return pl.pallas_call(
        kernel,
        out_shape=jax.ShapeDtypeStruct((B, S, D), jnp.float32),
        grid=(B,),
        in_specs=[
            pl.BlockSpec((1, S, D), lambda b: (b, 0, 0)),        # h
            pl.BlockSpec((1, D), lambda b: (0, 0)),              # ln1_g
            pl.BlockSpec((1, D), lambda b: (0, 0)),              # ln1_b
            pl.BlockSpec((D, qkv_w), lambda b: (0, 0)),          # wqkv (padded)
            pl.BlockSpec((1, qkv_w), lambda b: (0, 0)),          # bqkv (padded)
            pl.BlockSpec((D, D), lambda b: (0, 0)),              # wo
            pl.BlockSpec((1, D), lambda b: (0, 0)),              # bo
            pl.BlockSpec((1, D), lambda b: (0, 0)),              # ln2_g
            pl.BlockSpec((1, D), lambda b: (0, 0)),              # ln2_b
            pl.BlockSpec((D, mlp_w), lambda b: (0, 0)),          # w1 (padded)
            pl.BlockSpec((1, mlp_w), lambda b: (0, 0)),          # b1 (padded)
            pl.BlockSpec((mlp_w, D), lambda b: (0, 0)),          # w2 (padded)
            pl.BlockSpec((1, D), lambda b: (0, 0)),              # b2
        ],
        out_specs=pl.BlockSpec((1, S, D), lambda b: (b, 0, 0)),
        compiler_params=pltpu.CompilerParams(
            dimension_semantics=("parallel",)),
    )(h, lyr["ln1_g"], lyr["ln1_b"], lyr["wqkv"], lyr["bqkv"],
      lyr["wo"], lyr["bo"], lyr["ln2_g"], lyr["ln2_b"],
      lyr["w1"], lyr["b1"], lyr["w2"], lyr["b2"])


def pooled_head(pooled, g, b, w, eps):
    """pooled: [B, D] -> [B, proj]: post-LN fused with the visual projection."""
    B, D = pooled.shape
    Pd = w.shape[1]
    return pl.pallas_call(
        functools.partial(_head_kernel, eps=eps),
        out_shape=jax.ShapeDtypeStruct((B, Pd), jnp.float32),
        grid=(1,),
        in_specs=[
            pl.BlockSpec((B, D), lambda i: (0, 0)),
            pl.BlockSpec((1, D), lambda i: (0, 0)),
            pl.BlockSpec((1, D), lambda i: (0, 0)),
            pl.BlockSpec((D, Pd), lambda i: (0, 0)),
        ],
        out_specs=pl.BlockSpec((B, Pd), lambda i: (0, 0)),
    )(pooled, g, b, w)


# ----------------------------- model definition -----------------------------

class Config:
    image_size = 16
    patch_size = 8
    in_channels = 3
    hidden = 32
    heads = 2
    mlp = 64
    layers = 2
    proj_dim = 32
    eps = 1e-5


def init_params(cfg, seed=0):
    """PyTorch-like per-tensor parameters (synthetic stand-in for BLIP)."""
    key = jax.random.PRNGKey(seed)
    scale = 0.02

    def nrm(k, shape):
        return scale * jax.random.normal(k, shape, dtype=jnp.float32)

    num_patches = (cfg.image_size // cfg.patch_size) ** 2
    seq = num_patches + 1
    patch_dim = cfg.in_channels * cfg.patch_size * cfg.patch_size

    keys = iter(jax.random.split(key, 8 + cfg.layers * 16))
    p = {
        "patch_w": nrm(next(keys), (patch_dim, cfg.hidden)),     # conv as matmul
        "patch_b": jnp.zeros((cfg.hidden,), jnp.float32),
        "cls": nrm(next(keys), (cfg.hidden,)),
        "pos": nrm(next(keys), (seq, cfg.hidden)),
        "post_ln_g": jnp.ones((cfg.hidden,), jnp.float32),
        "post_ln_b": jnp.zeros((cfg.hidden,), jnp.float32),
        "proj_w": nrm(next(keys), (cfg.hidden, cfg.proj_dim)),   # no bias in BLIP
        "layers": [],
    }
    for _ in range(cfg.layers):
        lyr = {
            "ln1_g": jnp.ones((cfg.hidden,), jnp.float32),
            "ln1_b": jnp.zeros((cfg.hidden,), jnp.float32),
            "wq": nrm(next(keys), (cfg.hidden, cfg.hidden)),
            "bq": jnp.zeros((cfg.hidden,), jnp.float32),
            "wk": nrm(next(keys), (cfg.hidden, cfg.hidden)),
            "bk": jnp.zeros((cfg.hidden,), jnp.float32),
            "wv": nrm(next(keys), (cfg.hidden, cfg.hidden)),
            "bv": jnp.zeros((cfg.hidden,), jnp.float32),
            "wo": nrm(next(keys), (cfg.hidden, cfg.hidden)),
            "bo": jnp.zeros((cfg.hidden,), jnp.float32),
            "ln2_g": jnp.ones((cfg.hidden,), jnp.float32),
            "ln2_b": jnp.zeros((cfg.hidden,), jnp.float32),
            "w1": nrm(next(keys), (cfg.hidden, cfg.mlp)),
            "b1": jnp.zeros((cfg.mlp,), jnp.float32),
            "w2": nrm(next(keys), (cfg.mlp, cfg.hidden)),
            "b2": jnp.zeros((cfg.hidden,), jnp.float32),
        }
        p["layers"].append(lyr)
    return p


def fuse_params_for_kernels(raw, cfg):
    """One-time weight prep: fuse QKV, fold softmax scale into Q, pad widths
    to lane-dense multiples of 128, reshape biases/LN params to 2-D."""
    D = cfg.hidden
    dh = D // cfg.heads
    scale = 1.0 / math.sqrt(dh)
    qkv_w = _round_up(3 * D, 128)
    mlp_w = _round_up(cfg.mlp, 128)

    fused = {
        "patch_w": raw["patch_w"],
        "patch_b": raw["patch_b"].reshape(1, D),
        "pos_patch": raw["pos"][1:],                              # (Np, D)
        "cls_pos": (raw["cls"] + raw["pos"][0]).reshape(1, 1, D),  # CLS + pos[0]
        "post_ln_g": raw["post_ln_g"].reshape(1, D),
        "post_ln_b": raw["post_ln_b"].reshape(1, D),
        "proj_w": raw["proj_w"],
        "layers": [],
    }
    for lyr in raw["layers"]:
        wqkv = jnp.concatenate(
            [lyr["wq"] * scale, lyr["wk"], lyr["wv"]], axis=1)    # (D, 3D)
        bqkv = jnp.concatenate(
            [lyr["bq"] * scale, lyr["bk"], lyr["bv"]], axis=0)    # (3D,)
        wqkv = jnp.pad(wqkv, ((0, 0), (0, qkv_w - 3 * D)))
        bqkv = jnp.pad(bqkv, (0, qkv_w - 3 * D)).reshape(1, qkv_w)
        w1 = jnp.pad(lyr["w1"], ((0, 0), (0, mlp_w - cfg.mlp)))
        b1 = jnp.pad(lyr["b1"], (0, mlp_w - cfg.mlp)).reshape(1, mlp_w)
        w2 = jnp.pad(lyr["w2"], ((0, mlp_w - cfg.mlp), (0, 0)))
        fused["layers"].append({
            "ln1_g": lyr["ln1_g"].reshape(1, D),
            "ln1_b": lyr["ln1_b"].reshape(1, D),
            "wqkv": wqkv, "bqkv": bqkv,
            "wo": lyr["wo"], "bo": lyr["bo"].reshape(1, D),
            "ln2_g": lyr["ln2_g"].reshape(1, D),
            "ln2_b": lyr["ln2_b"].reshape(1, D),
            "w1": w1, "b1": b1, "w2": w2,
            "b2": lyr["b2"].reshape(1, D),
        })
    return fused


def get_image_features(params, vid, cfg=Config):
    """vid: NCHW float32 [B, 3, H, W] -> image features [B, proj_dim]."""
    B, C, H, W = vid.shape
    P = cfg.patch_size
    Hp, Wp = H // P, W // P
    D = cfg.hidden

    # --- im2col for the Conv2d(stride=patch): pure layout glue in XLA ---
    x = vid.reshape(B, C, Hp, P, Wp, P)
    x = jnp.transpose(x, (0, 2, 4, 1, 3, 5))             # [B, Hp, Wp, C, P, P]
    x = x.reshape(B, Hp * Wp, C * P * P)

    # --- fused patch-embedding kernel (matmul + bias + positional add) ---
    emb = patch_embed(x, params["patch_w"], params["patch_b"],
                      params["pos_patch"])               # [B, Np, D]
    cls = jnp.broadcast_to(params["cls_pos"], (B, 1, D))
    h = jnp.concatenate([cls, emb], axis=1)              # [B, S, D]

    # --- transformer encoder: ONE fused Pallas kernel per layer ---
    for lyr in params["layers"]:
        h = encoder_layer(h, lyr, cfg)

    # --- CLS pool, then fused post-LN + visual projection (LN is per-token,
    #     so pooling before LN is mathematically identical) ---
    pooled = h[:, 0, :]                                  # [B, D]
    feats = pooled_head(pooled, params["post_ln_g"], params["post_ln_b"],
                        params["proj_w"], cfg.eps)
    return feats                                         # [B, proj_dim]


if __name__ == "__main__":
    cfg = Config
    raw_params = init_params(cfg, seed=0)
    params = fuse_params_for_kernels(raw_params, cfg)    # one-time weight prep

    key = jax.random.PRNGKey(0)
    vid = jax.random.normal(
        key, (2, cfg.in_channels, cfg.image_size, cfg.image_size),
        dtype=jnp.float32)

    feats = jax.jit(lambda v: get_image_features(params, v))(vid)
    jax.block_until_ready(feats)
    assert feats.shape == (2, cfg.proj_dim)
    print("KERNEL_OK")
</pallas_src>

<mosaic_0001>
module attributes {stable_mosaic.version = 11 : i64} {
  func.func @_patch_embed_kernel(%arg0: i32, %arg1: memref<1x4x192xf32, #tpu.memory_space<vmem>>, %arg2: memref<192x32xf32, #tpu.memory_space<vmem>>, %arg3: memref<1x32xf32, #tpu.memory_space<vmem>>, %arg4: memref<4x32xf32, #tpu.memory_space<vmem>>, %arg5: memref<1x4x32xf32, #tpu.memory_space<vmem>>) attributes {dimension_semantics = [#tpu.dimension_semantics<parallel>], iteration_bounds = array<i64: 2>, scalar_prefetch = 0 : i64, scratch_operands = 0 : i64, tpu.core_type = #tpu.core_type<tc>, window_params = [{transform_indices = @transform_0, window_bounds = array<i64: 1, 4, 192>}, {pipeline_mode = #tpu.pipeline_mode<synchronous>, transform_indices = @transform_1, window_bounds = array<i64: 192, 32>}, {pipeline_mode = #tpu.pipeline_mode<synchronous>, transform_indices = @transform_2, window_bounds = array<i64: 1, 32>}, {pipeline_mode = #tpu.pipeline_mode<synchronous>, transform_indices = @transform_3, window_bounds = array<i64: 4, 32>}, {transform_indices = @transform_4, window_bounds = array<i64: 1, 4, 32>}]} {
    %c0 = arith.constant 0 : index
    %c0_0 = arith.constant 0 : index
    %c0_1 = arith.constant 0 : index
    %0 = vector.load %arg1[%c0, %c0_0, %c0_1] : memref<1x4x192xf32, #tpu.memory_space<vmem>>, vector<1x4x192xf32>
    %1 = vector.shape_cast %0 : vector<1x4x192xf32> to vector<4x192xf32>
    %c0_2 = arith.constant 0 : index
    %c0_3 = arith.constant 0 : index
    %2 = vector.load %arg2[%c0_2, %c0_3] : memref<192x32xf32, #tpu.memory_space<vmem>>, vector<192x32xf32>
    %cst = arith.constant dense<0.000000e+00> : vector<4x32xf32>
    %3 = tpu.matmul %1, %2, %cst {dimension_numbers = #tpu.dot_dimension_numbers<[1], [0], [0], [1], [0, 0, 1, 1], [], []>} : vector<4x192xf32>, vector<192x32xf32>, vector<4x32xf32> -> vector<4x32xf32>
    %c0_4 = arith.constant 0 : index
    %c0_5 = arith.constant 0 : index
    %4 = vector.load %arg3[%c0_4, %c0_5] : memref<1x32xf32, #tpu.memory_space<vmem>>, vector<1x32xf32>
    %5 = vector.broadcast %4 : vector<1x32xf32> to vector<4x32xf32>
    %6 = arith.addf %3, %5 : vector<4x32xf32>
    %c0_6 = arith.constant 0 : index
    %c0_7 = arith.constant 0 : index
    %7 = vector.load %arg4[%c0_6, %c0_7] : memref<4x32xf32, #tpu.memory_space<vmem>>, vector<4x32xf32>
    %8 = arith.addf %6, %7 : vector<4x32xf32>
    %c0_8 = arith.constant 0 : index
    %c0_9 = arith.constant 0 : index
    %c0_10 = arith.constant 0 : index
    %9 = vector.load %arg5[%c0_8, %c0_9, %c0_10] : memref<1x4x32xf32, #tpu.memory_space<vmem>>, vector<1x4x32xf32>
    %10 = vector.shape_cast %9 : vector<1x4x32xf32> to vector<4x32xf32>
    %11 = vector.shape_cast %8 : vector<4x32xf32> to vector<1x4x32xf32>
    tpu.vector_store %arg5[%c0_8, %c0_9, %c0_10], %11 {strides = array<i32>} : memref<1x4x32xf32, #tpu.memory_space<vmem>>, vector<1x4x32xf32>,
    return
  }
  func.func @transform_0(%arg0: i32) -> (i32, i32, i32) {
    %c0_i32 = arith.constant 0 : i32
    %c0_i32_0 = arith.constant 0 : i32
    %c0_i32_1 = arith.constant 0 : i32
    return %arg0, %c0_i32, %c0_i32_0 : i32, i32, i32
  }
  func.func @transform_1(%arg0: i32) -> (i32, i32) {
    %c0_i32 = arith.constant 0 : i32
    %c0_i32_0 = arith.constant 0 : i32
    %c0_i32_1 = arith.constant 0 : i32
    return %c0_i32, %c0_i32_0 : i32, i32
  }
  func.func @transform_2(%arg0: i32) -> (i32, i32) {
    %c0_i32 = arith.constant 0 : i32
    %c0_i32_0 = arith.constant 0 : i32
    %c0_i32_1 = arith.constant 0 : i32
    return %c0_i32, %c0_i32_0 : i32, i32
  }
  func.func @transform_3(%arg0: i32) -> (i32, i32) {
    %c0_i32 = arith.constant 0 : i32
    %c0_i32_0 = arith.constant 0 : i32
    %c0_i32_1 = arith.constant 0 : i32
    return %c0_i32, %c0_i32_0 : i32, i32
  }
  func.func @transform_4(%arg0: i32) -> (i32, i32, i32) {
    %c0_i32 = arith.constant 0 : i32
    %c0_i32_0 = arith.constant 0 : i32
    %c0_i32_1 = arith.constant 0 : i32
    return %arg0, %c0_i32, %c0_i32_0 : i32, i32, i32
  }
}

module attributes {stable_mosaic.version = 11 : i64} {
  func.func @_head_kernel(%arg0: i32, %arg1: memref<2x32xf32, #tpu.memory_space<vmem>>, %arg2: memref<1x32xf32, #tpu.memory_space<vmem>>, %arg3: memref<1x32xf32, #tpu.memory_space<vmem>>, %arg4: memref<32x32xf32, #tpu.memory_space<vmem>>, %arg5: memref<2x32xf32, #tpu.memory_space<vmem>>) attributes {dimension_semantics = [#tpu.dimension_semantics<arbitrary>], iteration_bounds = array<i64: 1>, scalar_prefetch = 0 : i64, scratch_operands = 0 : i64, tpu.core_type = #tpu.core_type<tc>, window_params = [{pipeline_mode = #tpu.pipeline_mode<synchronous>, transform_indices = @transform_0, window_bounds = array<i64: 2, 32>}, {pipeline_mode = #tpu.pipeline_mode<synchronous>, transform_indices = @transform_1, window_bounds = array<i64: 1, 32>}, {pipeline_mode = #tpu.pipeline_mode<synchronous>, transform_indices = @transform_2, window_bounds = array<i64: 1, 32>}, {pipeline_mode = #tpu.pipeline_mode<synchronous>, transform_indices = @transform_3, window_bounds = array<i64: 32, 32>}, {pipeline_mode = #tpu.pipeline_mode<synchronous>, transform_indices = @transform_4, window_bounds = array<i64: 2, 32>}]} {
    %c0 = arith.constant 0 : index
    %c0_0 = arith.constant 0 : index
    %0 = vector.load %arg1[%c0, %c0_0] : memref<2x32xf32, #tpu.memory_space<vmem>>, vector<2x32xf32>
    %c0_1 = arith.constant 0 : index
    %c0_2 = arith.constant 0 : index
    %1 = vector.load %arg2[%c0_1, %c0_2] : memref<1x32xf32, #tpu.memory_space<vmem>>, vector<1x32xf32>
    %c0_3 = arith.constant 0 : index
    %c0_4 = arith.constant 0 : index
    %2 = vector.load %arg3[%c0_3, %c0_4] : memref<1x32xf32, #tpu.memory_space<vmem>>, vector<1x32xf32>
    %cst = arith.constant dense<0.000000e+00> : vector<2xf32>
    %3 = vector.multi_reduction <add>, %0, %cst [1] : vector<2x32xf32> to vector<2xf32>
    %4 = vector.shape_cast %3 : vector<2xf32> to vector<2x1xf32>
    %cst_5 = arith.constant 3.200000e+01 : f32
    %5 = vector.broadcast %cst_5 : f32 to vector<2x1xf32>
    %6 = arith.divf %4, %5 : vector<2x1xf32>
    %7 = vector.broadcast %6 : vector<2x1xf32> to vector<2x32xf32>
    %8 = arith.subf %0, %7 : vector<2x32xf32>
    %9 = vector.broadcast %6 : vector<2x1xf32> to vector<2x32xf32>
    %10 = arith.subf %0, %9 : vector<2x32xf32>
    %11 = arith.mulf %8, %10 : vector<2x32xf32>
    %cst_6 = arith.constant dense<0.000000e+00> : vector<2xf32>
    %12 = vector.multi_reduction <add>, %11, %cst_6 [1] : vector<2x32xf32> to vector<2xf32>
    %13 = vector.shape_cast %12 : vector<2xf32> to vector<2x1xf32>
    %cst_7 = arith.constant 3.200000e+01 : f32
    %14 = vector.broadcast %cst_7 : f32 to vector<2x1xf32>
    %15 = arith.divf %13, %14 : vector<2x1xf32>
    %16 = vector.broadcast %6 : vector<2x1xf32> to vector<2x32xf32>
    %17 = arith.subf %0, %16 : vector<2x32xf32>
    %cst_8 = arith.constant 9.99999974E-6 : f32
    %18 = vector.broadcast %cst_8 : f32 to vector<2x1xf32>
    %19 = arith.addf %15, %18 : vector<2x1xf32>
    %20 = math.rsqrt %19 : vector<2x1xf32>
    %21 = vector.broadcast %20 : vector<2x1xf32> to vector<2x32xf32>
    %22 = arith.mulf %17, %21 : vector<2x32xf32>
    %23 = vector.broadcast %1 : vector<1x32xf32> to vector<2x32xf32>
    %24 = arith.mulf %22, %23 : vector<2x32xf32>
    %25 = vector.broadcast %2 : vector<1x32xf32> to vector<2x32xf32>
    %26 = arith.addf %24, %25 : vector<2x32xf32>
    %c0_9 = arith.constant 0 : index
    %c0_10 = arith.constant 0 : index
    %27 = vector.load %arg4[%c0_9, %c0_10] : memref<32x32xf32, #tpu.memory_space<vmem>>, vector<32x32xf32>
    %cst_11 = arith.constant dense<0.000000e+00> : vector<2x32xf32>
    %28 = tpu.matmul %26, %27, %cst_11 {dimension_numbers = #tpu.dot_dimension_numbers<[1], [0], [0], [1], [0, 0, 1, 1], [], []>} : vector<2x32xf32>, vector<32x32xf32>, vector<2x32xf32> -> vector<2x32xf32>
    %c0_12 = arith.constant 0 : index
    %c0_13 = arith.constant 0 : index
    %29 = vector.load %arg5[%c0_12, %c0_13] : memref<2x32xf32, #tpu.memory_space<vmem>>, vector<2x32xf32>
    tpu.vector_store %arg5[%c0_12, %c0_13], %28 {strides = array<i32>} : memref<2x32xf32, #tpu.memory_space<vmem>>, vector<2x32xf32>,
    return
  }
  func.func @transform_0(%arg0: i32) -> (i32, i32) {
    %c0_i32 = arith.constant 0 : i32
    %c0_i32_0 = arith.constant 0 : i32
    %c0_i32_1 = arith.constant 0 : i32
    return %c0_i32, %c0_i32_0 : i32, i32
  }
  func.func @transform_1(%arg0: i32) -> (i32, i32) {
    %c0_i32 = arith.constant 0 : i32
    %c0_i32_0 = arith.constant 0 : i32
    %c0_i32_1 = arith.constant 0 : i32
    return %c0_i32, %c0_i32_0 : i32, i32
  }
  func.func @transform_2(%arg0: i32) -> (i32, i32) {
    %c0_i32 = arith.constant 0 : i32
    %c0_i32_0 = arith.constant 0 : i32
    %c0_i32_1 = arith.constant 0 : i32
    return %c0_i32, %c0_i32_0 : i32, i32
  }
  func.func @transform_3(%arg0: i32) -> (i32, i32) {
    %c0_i32 = arith.constant 0 : i32
    %c0_i32_0 = arith.constant 0 : i32
    %c0_i32_1 = arith.constant 0 : i32
    return %c0_i32, %c0_i32_0 : i32, i32
  }
  func.func @transform_4(%arg0: i32) -> (i32, i32) {
    %c0_i32 = arith.constant 0 : i32
    %c0_i32_0 = arith.constant 0 : i32
    %c0_i32_1 = arith.constant 0 : i32
    return %c0_i32, %c0_i32_0 : i32, i32
  }
}

module attributes {stable_mosaic.version = 11 : i64} {
  func.func @_encoder_layer_kernel(%arg0: i32, %arg1: memref<1x5x32xf32, #tpu.memory_space<vmem>>, %arg2: memref<1x32xf32, #tpu.memory_space<vmem>>, %arg3: memref<1x32xf32, #tpu.memory_space<vmem>>, %arg4: memref<32x128xf32, #tpu.memory_space<vmem>>, %arg5: memref<1x128xf32, #tpu.memory_space<vmem>>, %arg6: memref<32x32xf32, #tpu.memory_space<vmem>>, %arg7: memref<1x32xf32, #tpu.memory_space<vmem>>, %arg8: memref<1x32xf32, #tpu.memory_space<vmem>>, %arg9: memref<1x32xf32, #tpu.memory_space<vmem>>, %arg10: memref<32x128xf32, #tpu.memory_space<vmem>>, %arg11: memref<1x128xf32, #tpu.memory_space<vmem>>, %arg12: memref<128x32xf32, #tpu.memory_space<vmem>>, %arg13: memref<1x32xf32, #tpu.memory_space<vmem>>, %arg14: memref<1x5x32xf32, #tpu.memory_space<vmem>>) attributes {dimension_semantics = [#tpu.dimension_semantics<parallel>], iteration_bounds = array<i64: 2>, scalar_prefetch = 0 : i64, scratch_operands = 0 : i64, tpu.core_type = #tpu.core_type<tc>, window_params = [{transform_indices = @transform_0, window_bounds = array<i64: 1, 5, 32>}, {pipeline_mode = #tpu.pipeline_mode<synchronous>, transform_indices = @transform_1, window_bounds = array<i64: 1, 32>}, {pipeline_mode = #tpu.pipeline_mode<synchronous>, transform_indices = @transform_2, window_bounds = array<i64: 1, 32>}, {pipeline_mode = #tpu.pipeline_mode<synchronous>, transform_indices = @transform_3, window_bounds = array<i64: 32, 128>}, {pipeline_mode = #tpu.pipeline_mode<synchronous>, transform_indices = @transform_4, window_bounds = array<i64: 1, 128>}, {pipeline_mode = #tpu.pipeline_mode<synchronous>, transform_indices = @transform_5, window_bounds = array<i64: 32, 32>}, {pipeline_mode = #tpu.pipeline_mode<synchronous>, transform_indices = @transform_6, window_bounds = array<i64: 1, 32>}, {pipeline_mode = #tpu.pipeline_mode<synchronous>, transform_indices = @transform_7, window_bounds = array<i64: 1, 32>}, {pipeline_mode = #tpu.pipeline_mode<synchronous>, transform_indices = @transform_8, window_bounds = array<i64: 1, 32>}, {pipeline_mode = #tpu.pipeline_mode<synchronous>, transform_indices = @transform_9, window_bounds = array<i64: 32, 128>}, {pipeline_mode = #tpu.pipeline_mode<synchronous>, transform_indices = @transform_10, window_bounds = array<i64: 1, 128>}, {pipeline_mode = #tpu.pipeline_mode<synchronous>, transform_indices = @transform_11, window_bounds = array<i64: 128, 32>}, {pipeline_mode = #tpu.pipeline_mode<synchronous>, transform_indices = @transform_12, window_bounds = array<i64: 1, 32>}, {transform_indices = @transform_13, window_bounds = array<i64: 1, 5, 32>}]} {
    %c0 = arith.constant 0 : index
    %c0_0 = arith.constant 0 : index
    %c0_1 = arith.constant 0 : index
    %0 = vector.load %arg1[%c0, %c0_0, %c0_1] : memref<1x5x32xf32, #tpu.memory_space<vmem>>, vector<1x5x32xf32>
    %1 = vector.shape_cast %0 : vector<1x5x32xf32> to vector<5x32xf32>
    %c0_2 = arith.constant 0 : index
    %c0_3 = arith.constant 0 : index
    %2 = vector.load %arg2[%c0_2, %c0_3] : memref<1x32xf32, #tpu.memory_space<vmem>>, vector<1x32xf32>
    %c0_4 = arith.constant 0 : index
    %c0_5 = arith.constant 0 : index
    %3 = vector.load %arg3[%c0_4, %c0_5] : memref<1x32xf32, #tpu.memory_space<vmem>>, vector<1x32xf32>
    %cst = arith.constant dense<0.000000e+00> : vector<5xf32>
    %4 = vector.multi_reduction <add>, %1, %cst [1] : vector<5x32xf32> to vector<5xf32>
    %5 = vector.shape_cast %4 : vector<5xf32> to vector<5x1xf32>
    %cst_6 = arith.constant 3.200000e+01 : f32
    %6 = vector.broadcast %cst_6 : f32 to vector<5x1xf32>
    %7 = arith.divf %5, %6 : vector<5x1xf32>
    %8 = vector.broadcast %7 : vector<5x1xf32> to vector<5x32xf32>
    %9 = arith.subf %1, %8 : vector<5x32xf32>
    %10 = vector.broadcast %7 : vector<5x1xf32> to vector<5x32xf32>
    %11 = arith.subf %1, %10 : vector<5x32xf32>
    %12 = arith.mulf %9, %11 : vector<5x32xf32>
    %cst_7 = arith.constant dense<0.000000e+00> : vector<5xf32>
    %13 = vector.multi_reduction <add>, %12, %cst_7 [1] : vector<5x32xf32> to vector<5xf32>
    %14 = vector.shape_cast %13 : vector<5xf32> to vector<5x1xf32>
    %cst_8 = arith.constant 3.200000e+01 : f32
    %15 = vector.broadcast %cst_8 : f32 to vector<5x1xf32>
    %16 = arith.divf %14, %15 : vector<5x1xf32>
    %17 = vector.broadcast %7 : vector<5x1xf32> to vector<5x32xf32>
    %18 = arith.subf %1, %17 : vector<5x32xf32>
    %cst_9 = arith.constant 9.99999974E-6 : f32
    %19 = vector.broadcast %cst_9 : f32 to vector<5x1xf32>
    %20 = arith.addf %16, %19 : vector<5x1xf32>
    %21 = math.rsqrt %20 : vector<5x1xf32>
    %22 = vector.broadcast %21 : vector<5x1xf32> to vector<5x32xf32>
    %23 = arith.mulf %18, %22 : vector<5x32xf32>
    %24 = vector.broadcast %2 : vector<1x32xf32> to vector<5x32xf32>
    %25 = arith.mulf %23, %24 : vector<5x32xf32>
    %26 = vector.broadcast %3 : vector<1x32xf32> to vector<5x32xf32>
    %27 = arith.addf %25, %26 : vector<5x32xf32>
    %c0_10 = arith.constant 0 : index
    %c0_11 = arith.constant 0 : index
    %28 = vector.load %arg4[%c0_10, %c0_11] : memref<32x128xf32, #tpu.memory_space<vmem>>, vector<32x128xf32>
    %cst_12 = arith.constant dense<0.000000e+00> : vector<5x128xf32>
    %29 = tpu.matmul %27, %28, %cst_12 {dimension_numbers = #tpu.dot_dimension_numbers<[1], [0], [0], [1], [0, 0, 1, 1], [], []>} : vector<5x32xf32>, vector<32x128xf32>, vector<5x128xf32> -> vector<5x128xf32>
    %c0_13 = arith.constant 0 : index
    %c0_14 = arith.constant 0 : index
    %30 = vector.load %arg5[%c0_13, %c0_14] : memref<1x128xf32, #tpu.memory_space<vmem>>, vector<1x128xf32>
    %31 = vector.broadcast %30 : vector<1x128xf32> to vector<5x128xf32>
    %32 = arith.addf %29, %31 : vector<5x128xf32>
    %c0_15 = arith.constant 0 : index
    %c0_16 = arith.constant 0 : index
    %33 = vector.load %arg6[%c0_15, %c0_16] : memref<32x32xf32, #tpu.memory_space<vmem>>, vector<32x32xf32>
    %cst_17 = arith.constant 0.000000e+00 : f32
    %34 = vector.broadcast %cst_17 : f32 to vector<5x32xf32>
    %35 = vector.extract_strided_slice %32 {offsets = [0, 0], sizes = [5, 16], strides = [1, 1]} : vector<5x128xf32> to vector<5x16xf32>
    %36 = vector.extract_strided_slice %32 {offsets = [0, 32], sizes = [5, 16], strides = [1, 1]} : vector<5x128xf32> to vector<5x16xf32>
    %37 = vector.extract_strided_slice %32 {offsets = [0, 64], sizes = [5, 16], strides = [1, 1]} : vector<5x128xf32> to vector<5x16xf32>
    %38 = tpu.transpose %36, [1, 0] : vector<5x16xf32> -> vector<16x5xf32>
    %cst_18 = arith.constant dense<0.000000e+00> : vector<5x5xf32>
    %39 = tpu.matmul %35, %38, %cst_18 {dimension_numbers = #tpu.dot_dimension_numbers<[1], [0], [0], [1], [0, 0, 1, 1], [], []>} : vector<5x16xf32>, vector<16x5xf32>, vector<5x5xf32> -> vector<5x5xf32>
    %cst_19 = arith.constant dense<0xFF800000> : vector<5xf32>
    %40 = vector.multi_reduction <maximumf>, %39, %cst_19 [1] : vector<5x5xf32> to vector<5xf32>
    %41 = vector.shape_cast %40 : vector<5xf32> to vector<5x1xf32>
    %42 = vector.broadcast %41 : vector<5x1xf32> to vector<5x5xf32>
    %43 = arith.subf %39, %42 : vector<5x5xf32>
    %44 = math.exp %43 : vector<5x5xf32>
    %cst_20 = arith.constant dense<0.000000e+00> : vector<5xf32>
    %45 = vector.multi_reduction <add>, %44, %cst_20 [1] : vector<5x5xf32> to vector<5xf32>
    %46 = vector.shape_cast %45 : vector<5xf32> to vector<5x1xf32>
    %47 = vector.broadcast %46 : vector<5x1xf32> to vector<5x5xf32>
    %48 = arith.divf %44, %47 : vector<5x5xf32>
    %cst_21 = arith.constant dense<0.000000e+00> : vector<5x16xf32>
    %49 = tpu.matmul %48, %37, %cst_21 {dimension_numbers = #tpu.dot_dimension_numbers<[1], [0], [0], [1], [0, 0, 1, 1], [], []>} : vector<5x5xf32>, vector<5x16xf32>, vector<5x16xf32> -> vector<5x16xf32>
    %50 = vector.extract_strided_slice %33 {offsets = [0, 0], sizes = [16, 32], strides = [1, 1]} : vector<32x32xf32> to vector<16x32xf32>
    %cst_22 = arith.constant dense<0.000000e+00> : vector<5x32xf32>
    %51 = tpu.matmul %49, %50, %cst_22 {dimension_numbers = #tpu.dot_dimension_numbers<[1], [0], [0], [1], [0, 0, 1, 1], [], []>} : vector<5x16xf32>, vector<16x32xf32>, vector<5x32xf32> -> vector<5x32xf32>
    %52 = arith.addf %34, %51 : vector<5x32xf32>
    %53 = vector.extract_strided_slice %32 {offsets = [0, 16], sizes = [5, 16], strides = [1, 1]} : vector<5x128xf32> to vector<5x16xf32>
    %54 = vector.extract_strided_slice %32 {offsets = [0, 48], sizes = [5, 16], strides = [1, 1]} : vector<5x128xf32> to vector<5x16xf32>
    %55 = vector.extract_strided_slice %32 {offsets = [0, 80], sizes = [5, 16], strides = [1, 1]} : vector<5x128xf32> to vector<5x16xf32>
    %56 = tpu.transpose %54, [1, 0] : vector<5x16xf32> -> vector<16x5xf32>
    %cst_23 = arith.constant dense<0.000000e+00> : vector<5x5xf32>
    %57 = tpu.matmul %53, %56, %cst_23 {dimension_numbers = #tpu.dot_dimension_numbers<[1], [0], [0], [1], [0, 0, 1, 1], [], []>} : vector<5x16xf32>, vector<16x5xf32>, vector<5x5xf32> -> vector<5x5xf32>
    %cst_24 = arith.constant dense<0xFF800000> : vector<5xf32>
    %58 = vector.multi_reduction <maximumf>, %57, %cst_24 [1] : vector<5x5xf32> to vector<5xf32>
    %59 = vector.shape_cast %58 : vector<5xf32> to vector<5x1xf32>
    %60 = vector.broadcast %59 : vector<5x1xf32> to vector<5x5xf32>
    %61 = arith.subf %57, %60 : vector<5x5xf32>
    %62 = math.exp %61 : vector<5x5xf32>
    %cst_25 = arith.constant dense<0.000000e+00> : vector<5xf32>
    %63 = vector.multi_reduction <add>, %62, %cst_25 [1] : vector<5x5xf32> to vector<5xf32>
    %64 = vector.shape_cast %63 : vector<5xf32> to vector<5x1xf32>
    %65 = vector.broadcast %64 : vector<5x1xf32> to vector<5x5xf32>
    %66 = arith.divf %62, %65 : vector<5x5xf32>
    %cst_26 = arith.constant dense<0.000000e+00> : vector<5x16xf32>
    %67 = tpu.matmul %66, %55, %cst_26 {dimension_numbers = #tpu.dot_dimension_numbers<[1], [0], [0], [1], [0, 0, 1, 1], [], []>} : vector<5x5xf32>, vector<5x16xf32>, vector<5x16xf32> -> vector<5x16xf32>
    %68 = vector.extract_strided_slice %33 {offsets = [16, 0], sizes = [16, 32], strides = [1, 1]} : vector<32x32xf32> to vector<16x32xf32>
    %cst_27 = arith.constant dense<0.000000e+00> : vector<5x32xf32>
    %69 = tpu.matmul %67, %68, %cst_27 {dimension_numbers = #tpu.dot_dimension_numbers<[1], [0], [0], [1], [0, 0, 1, 1], [], []>} : vector<5x16xf32>, vector<16x32xf32>, vector<5x32xf32> -> vector<5x32xf32>
    %70 = arith.addf %52, %69 : vector<5x32xf32>
    %71 = arith.addf %1, %70 : vector<5x32xf32>
    %c0_28 = arith.constant 0 : index
    %c0_29 = arith.constant 0 : index
    %72 = vector.load %arg7[%c0_28, %c0_29] : memref<1x32xf32, #tpu.memory_space<vmem>>, vector<1x32xf32>
    %73 = vector.broadcast %72 : vector<1x32xf32> to vector<5x32xf32>
    %74 = arith.addf %71, %73 : vector<5x32xf32>
    %c0_30 = arith.constant 0 : index
    %c0_31 = arith.constant 0 : index
    %75 = vector.load %arg8[%c0_30, %c0_31] : memref<1x32xf32, #tpu.memory_space<vmem>>, vector<1x32xf32>
    %c0_32 = arith.constant 0 : index
    %c0_33 = arith.constant 0 : index
    %76 = vector.load %arg9[%c0_32, %c0_33] : memref<1x32xf32, #tpu.memory_space<vmem>>, vector<1x32xf32>
    %cst_34 = arith.constant dense<0.000000e+00> : vector<5xf32>
    %77 = vector.multi_reduction <add>, %74, %cst_34 [1] : vector<5x32xf32> to vector<5xf32>
    %78 = vector.shape_cast %77 : vector<5xf32> to vector<5x1xf32>
    %cst_35 = arith.constant 3.200000e+01 : f32
    %79 = vector.broadcast %cst_35 : f32 to vector<5x1xf32>
    %80 = arith.divf %78, %79 : vector<5x1xf32>
    %81 = vector.broadcast %80 : vector<5x1xf32> to vector<5x32xf32>
    %82 = arith.subf %74, %81 : vector<5x32xf32>
    %83 = vector.broadcast %80 : vector<5x1xf32> to vector<5x32xf32>
    %84 = arith.subf %74, %83 : vector<5x32xf32>
    %85 = arith.mulf %82, %84 : vector<5x32xf32>
    %cst_36 = arith.constant dense<0.000000e+00> : vector<5xf32>
    %86 = vector.multi_reduction <add>, %85, %cst_36 [1] : vector<5x32xf32> to vector<5xf32>
    %87 = vector.shape_cast %86 : vector<5xf32> to vector<5x1xf32>
    %cst_37 = arith.constant 3.200000e+01 : f32
    %88 = vector.broadcast %cst_37 : f32 to vector<5x1xf32>
    %89 = arith.divf %87, %88 : vector<5x1xf32>
    %90 = vector.broadcast %80 : vector<5x1xf32> to vector<5x32xf32>
    %91 = arith.subf %74, %90 : vector<5x32xf32>
    %cst_38 = arith.constant 9.99999974E-6 : f32
    %92 = vector.broadcast %cst_38 : f32 to vector<5x1xf32>
    %93 = arith.addf %89, %92 : vector<5x1xf32>
    %94 = math.rsqrt %93 : vector<5x1xf32>
    %95 = vector.broadcast %94 : vector<5x1xf32> to vector<5x32xf32>
    %96 = arith.mulf %91, %95 : vector<5x32xf32>
    %97 = vector.broadcast %75 : vector<1x32xf32> to vector<5x32xf32>
    %98 = arith.mulf %96, %97 : vector<5x32xf32>
    %99 = vector.broadcast %76 : vector<1x32xf32> to vector<5x32xf32>
    %100 = arith.addf %98, %99 : vector<5x32xf32>
    %c0_39 = arith.constant 0 : index
    %c0_40 = arith.constant 0 : index
    %101 = vector.load %arg10[%c0_39, %c0_40] : memref<32x128xf32, #tpu.memory_space<vmem>>, vector<32x128xf32>
    %cst_41 = arith.constant dense<0.000000e+00> : vector<5x128xf32>
    %102 = tpu.matmul %100, %101, %cst_41 {dimension_numbers = #tpu.dot_dimension_numbers<[1], [0], [0], [1], [0, 0, 1, 1], [], []>} : vector<5x32xf32>, vector<32x128xf32>, vector<5x128xf32> -> vector<5x128xf32>
    %c0_42 = arith.constant 0 : index
    %c0_43 = arith.constant 0 : index
    %103 = vector.load %arg11[%c0_42, %c0_43] : memref<1x128xf32, #tpu.memory_space<vmem>>, vector<1x128xf32>
    %104 = vector.broadcast %103 : vector<1x128xf32> to vector<5x128xf32>
    %105 = arith.addf %102, %104 : vector<5x128xf32>
    %cst_44 = arith.constant 5.000000e-01 : f32
    %106 = vector.broadcast %cst_44 : f32 to vector<5x128xf32>
    %107 = arith.mulf %106, %105 : vector<5x128xf32>
    %cst_45 = arith.constant 4.471500e-02 : f32
    %108 = vector.broadcast %cst_45 : f32 to vector<5x128xf32>
    %109 = arith.mulf %108, %105 : vector<5x128xf32>
    %110 = arith.mulf %109, %105 : vector<5x128xf32>
    %111 = arith.mulf %110, %105 : vector<5x128xf32>
    %112 = arith.addf %105, %111 : vector<5x128xf32>
    %cst_46 = arith.constant 0.797884583 : f32
    %113 = vector.broadcast %cst_46 : f32 to vector<5x128xf32>
    %114 = arith.mulf %113, %112 : vector<5x128xf32>
    %115 = math.tanh %114 : vector<5x128xf32>
    %cst_47 = arith.constant 1.000000e+00 : f32
    %116 = vector.broadcast %cst_47 : f32 to vector<5x128xf32>
    %117 = arith.addf %116, %115 : vector<5x128xf32>
    %118 = arith.mulf %107, %117 : vector<5x128xf32>
    %c0_48 = arith.constant 0 : index
    %c0_49 = arith.constant 0 : index
    %119 = vector.load %arg12[%c0_48, %c0_49] : memref<128x32xf32, #tpu.memory_space<vmem>>, vector<128x32xf32>
    %cst_50 = arith.constant dense<0.000000e+00> : vector<5x32xf32>
    %120 = tpu.matmul %118, %119, %cst_50 {dimension_numbers = #tpu.dot_dimension_numbers<[1], [0], [0], [1], [0, 0, 1, 1], [], []>} : vector<5x128xf32>, vector<128x32xf32>, vector<5x32xf32> -> vector<5x32xf32>
    %121 = arith.addf %74, %120 : vector<5x32xf32>
    %c0_51 = arith.constant 0 : index
    %c0_52 = arith.constant 0 : index
    %122 = vector.load %arg13[%c0_51, %c0_52] : memref<1x32xf32, #tpu.memory_space<vmem>>, vector<1x32xf32>
    %123 = vector.broadcast %122 : vector<1x32xf32> to vector<5x32xf32>
    %124 = arith.addf %121, %123 : vector<5x32xf32>
    %c0_53 = arith.constant 0 : index
    %c0_54 = arith.constant 0 : index
    %c0_55 = arith.constant 0 : index
    %125 = vector.load %arg14[%c0_53, %c0_54, %c0_55] : memref<1x5x32xf32, #tpu.memory_space<vmem>>, vector<1x5x32xf32>
    %126 = vector.shape_cast %125 : vector<1x5x32xf32> to vector<5x32xf32>
    %127 = vector.shape_cast %124 : vector<5x32xf32> to vector<1x5x32xf32>
    tpu.vector_store %arg14[%c0_53, %c0_54, %c0_55], %127 {strides = array<i32>} : memref<1x5x32xf32, #tpu.memory_space<vmem>>, vector<1x5x32xf32>,
    return
  }
  func.func @transform_0(%arg0: i32) -> (i32, i32, i32) {
    %c0_i32 = arith.constant 0 : i32
    %c0_i32_0 = arith.constant 0 : i32
    %c0_i32_1 = arith.constant 0 : i32
    return %arg0, %c0_i32, %c0_i32_0 : i32, i32, i32
  }
  func.func @transform_1(%arg0: i32) -> (i32, i32) {
    %c0_i32 = arith.constant 0 : i32
    %c0_i32_0 = arith.constant 0 : i32
    %c0_i32_1 = arith.constant 0 : i32
    return %c0_i32, %c0_i32_0 : i32, i32
  }
  func.func @transform_2(%arg0: i32) -> (i32, i32) {
    %c0_i32 = arith.constant 0 : i32
    %c0_i32_0 = arith.constant 0 : i32
    %c0_i32_1 = arith.constant 0 : i32
    return %c0_i32, %c0_i32_0 : i32, i32
  }
  func.func @transform_3(%arg0: i32) -> (i32, i32) {
    %c0_i32 = arith.constant 0 : i32
    %c0_i32_0 = arith.constant 0 : i32
    %c0_i32_1 = arith.constant 0 : i32
    return %c0_i32, %c0_i32_0 : i32, i32
  }
  func.func @transform_4(%arg0: i32) -> (i32, i32) {
    %c0_i32 = arith.constant 0 : i32
    %c0_i32_0 = arith.constant 0 : i32
    %c0_i32_1 = arith.constant 0 : i32
    return %c0_i32, %c0_i32_0 : i32, i32
  }
  func.func @transform_5(%arg0: i32) -> (i32, i32) {
    %c0_i32 = arith.constant 0 : i32
    %c0_i32_0 = arith.constant 0 : i32
    %c0_i32_1 = arith.constant 0 : i32
    return %c0_i32, %c0_i32_0 : i32, i32
  }
  func.func @transform_6(%arg0: i32) -> (i32, i32) {
    %c0_i32 = arith.constant 0 : i32
    %c0_i32_0 = arith.constant 0 : i32
    %c0_i32_1 = arith.constant 0 : i32
    return %c0_i32, %c0_i32_0 : i32, i32
  }
  func.func @transform_7(%arg0: i32) -> (i32, i32) {
    %c0_i32 = arith.constant 0 : i32
    %c0_i32_0 = arith.constant 0 : i32
    %c0_i32_1 = arith.constant 0 : i32
    return %c0_i32, %c0_i32_0 : i32, i32
  }
  func.func @transform_8(%arg0: i32) -> (i32, i32) {
    %c0_i32 = arith.constant 0 : i32
    %c0_i32_0 = arith.constant 0 : i32
    %c0_i32_1 = arith.constant 0 : i32
    return %c0_i32, %c0_i32_0 : i32, i32
  }
  func.func @transform_9(%arg0: i32) -> (i32, i32) {
    %c0_i32 = arith.constant 0 : i32
    %c0_i32_0 = arith.constant 0 : i32
    %c0_i32_1 = arith.constant 0 : i32
    return %c0_i32, %c0_i32_0 : i32, i32
  }
  func.func @transform_10(%arg0: i32) -> (i32, i32) {
    %c0_i32 = arith.constant 0 : i32
    %c0_i32_0 = arith.constant 0 : i32
    %c0_i32_1 = arith.constant 0 : i32
    return %c0_i32, %c0_i32_0 : i32, i32
  }
  func.func @transform_11(%arg0: i32) -> (i32, i32) {
    %c0_i32 = arith.constant 0 : i32
    %c0_i32_0 = arith.constant 0 : i32
    %c0_i32_1 = arith.constant 0 : i32
    return %c0_i32, %c0_i32_0 : i32, i32
  }
  func.func @transform_12(%arg0: i32) -> (i32, i32) {
    %c0_i32 = arith.constant 0 : i32
    %c0_i32_0 = arith.constant 0 : i32
    %c0_i32_1 = arith.constant 0 : i32
    return %c0_i32, %c0_i32_0 : i32, i32
  }
  func.func @transform_13(%arg0: i32) -> (i32, i32, i32) {
    %c0_i32 = arith.constant 0 : i32
    %c0_i32_0 = arith.constant 0 : i32
    %c0_i32_1 = arith.constant 0 : i32
    return %arg0, %c0_i32, %c0_i32_0 : i32, i32, i32
  }
}

</mosaic_0001>

<llo_original>
// kernel: _lambda_.7
$region0: #{_lambda_.7}
  #allocation0 [shape = 'u32[]', space=smem, size = 0x4, offset = 0x4, fixed_abs, tag = 'smem constant byte address 0x4 - core index']
  #allocation1 [shape = 'u32[144,128]{1,0:T(1,128)}', space=vmem, size = 0x12000, scoped, tag = 'internal scratch']
  %s0 = inlined_call_operand.vmem [shape: f32[2,32], index: 0, kind: input, shape index: {}]
  %s1 = inlined_call_operand.vmem [shape: f32[1,32], index: 1, kind: input, shape index: {}]
  %s2 = inlined_call_operand.vmem [shape: f32[1,32], index: 2, kind: input, shape index: {}]
  %s3 = inlined_call_operand.vmem [shape: f32[32,32], index: 3, kind: input, shape index: {}]
  %s4 = inlined_call_operand.hbm [shape: f32[2,32], index: 4, kind: output, shape index: {}]
  %s5 = sld [smem:[#allocation0]]
  $region26: #{_lambda_.7} parent=0
    _
  %s7 = ssub.s32 1, %s5
  %s8 = scalar_select 0, %s7, %s5
  $region1: #{_lambda_.7} parent=0
    #allocation2 [shape = 'u8[1024]{0}', space=vmem, size = 0x400, scoped, tag = 'output window, operand 0, single buffered']
    #allocation3 [shape = 's32[1]{0}', space=sflag, size = 0x4, scoped, tag = 'scoped memory for _lambda_.7']
    %9 = vsyncpa [#allocation3], 0
    // Predicated region
    $region2: #{_lambda_.7} parent=1 // pred_check
      _
    $region3: #{_lambda_.7} parent=1 // pred_check_branch
      %11 = sbr.rel (0) target = $region5
    $region4: #{_lambda_.7} parent=1 // pred_region
      _
    $region5: #{_lambda_.7} parent=1 // pred_fallthru
      _
    // Predicated region
    $region6: #{_lambda_.7} parent=1 // pred_check
      _
    $region7: #{_lambda_.7} parent=1 // pred_check_branch
      %13 = sbr.rel (0) target = $region9
    $region8: #{_lambda_.7} parent=1 // pred_region
      _
    $region9: #{_lambda_.7} parent=1 // pred_fallthru
      _
    // Predicated region
    $region10: #{_lambda_.7} parent=1 // pred_check
      _
    $region11: #{_lambda_.7} parent=1 // pred_check_branch
      %15 = sbr.rel (0) target = $region13
    $region12: #{_lambda_.7} parent=1 // pred_region
      _
    $region13: #{_lambda_.7} parent=1 // pred_fallthru
      _
    // Predicated region
    $region14: #{_lambda_.7} parent=1 // pred_check
      _
    $region15: #{_lambda_.7} parent=1 // pred_check_branch
      %17 = sbr.rel (0) target = $region17
    $region16: #{_lambda_.7} parent=1 // pred_region
      _
    $region17: #{_lambda_.7} parent=1 // pred_fallthru
      _
    %v18 = vld [vmem:[%s0] sm:$0x3]
    %v19 = vld [vmem:[%s1] sm:$0x1]
    %v20 = vld [vmem:[%s2] sm:$0x1]
    %vm21 = vcmask 254976
    %v22 = vsel %vm21, %v18, 0.0
    %23 = vadd.xlane.f32.xlu0 %v22
    %v24 = vpop.xlane.xlu0 %23
    %v25 = vrcp.pop 32.0
    %v26 = vmul.f32 %v24, %v25
    %v27 = vsub.f32 %v18, %v26
    %v28 = vmul.f32 %v27, %v27
    %v29 = vsel %vm21, %v28, 0.0
    %30 = vadd.xlane.f32.xlu0 %v29
    %v31 = vpop.xlane.xlu0 %30
    %v32 = vmul.f32 %v31, %v25
    %v33 = vadd.f32 %v32, 1e-05
    %v34 = vrsqrt.pop %v33
    %v35 = vmul.f32 %v27, %v34
    %v37 = vlaneseq
    %v38 = vshrl.u32 %v37, 7
    %v39 = vsub.s32 0, %v38
    %v40 = vrot.slane %v19, %v39
    %v42 = vmul.f32 %v35, %v40
    %v44 = vlaneseq
    %v45 = vshrl.u32 %v44, 7
    %v46 = vsub.s32 0, %v45
    %v47 = vrot.slane %v20, %v46
    %v49 = vadd.f32 %v42, %v47
    %v50 = vld [vmem:[%s3] sm:$0xff]
    %v51 = vld [vmem:[%s3 + $0x8] sm:$0xff]
    %v52 = vld [vmem:[%s3 + $0x10] sm:$0xff]
    %v53 = vld [vmem:[%s3 + $0x18] sm:$0xff]
    %vm54 = vcmask 261120
    %v56 = vsel %vm54, %v49, 0
    %58 = vmatprep.subr.mxu0 0.0
    %59 = vmatpush1.msra.mxu0 0.0
    %60 = vmatprep.subr.mxu0 0.0
    %61 = vmatpush1.msra.mxu0 0.0
    %62 = vmatprep.subr.mxu0 0.0
    %63 = vmatpush1.msra.mxu0 0.0
    %64 = vmatprep.subr.mxu0 0.0
    %65 = vmatpush1.msra.mxu0 0.0
    %66 = vmatprep.subr.mxu0 0.0
    %67 = vmatpush1.msra.mxu0 0.0
    %68 = vmatprep.subr.mxu0 0.0
    %69 = vmatpush1.msra.mxu0 0.0
    %70 = vmatprep.subr.mxu0 0.0
    %71 = vmatpush1.msra.mxu0 0.0
    %72 = vmatprep.subr.mxu0 0.0
    %73 = vmatpush1.msra.mxu0 0.0
    %74 = vmatprep.subr.mxu0 0.0
    %75 = vmatpush1.msra.mxu0 0.0
    %76 = vmatprep.subr.mxu0 0.0
    %77 = vmatpush1.msra.mxu0 0.0
    %78 = vmatprep.subr.mxu0 0.0
    %79 = vmatpush1.msra.mxu0 0.0
    %80 = vmatprep.subr.mxu0 0.0
    %81 = vmatpush1.msra.mxu0 0.0
    %82 = vmatprep.subr.mxu0 0.0
    %83 = vmatpush1.msra.mxu0 %v53
    %84 = vmatprep.subr.mxu0 0.0
    %85 = vmatpush1.msra.mxu0 %v52
    %86 = vmatprep.subr.mxu0 0.0
    %87 = vmatpush1.msra.mxu0 %v51
    %88 = vmatprep.subr.mxu0 0.0
    %89 = vmatpush1.msra.mxu0 %v50
    %90 = vmatprep.subr.mxu0 0.0
    %91 = vmatpush2.msra.mxu0 0.0
    %92 = vmatprep.subr.mxu0 0.0
    %93 = vmatpush2.msra.mxu0 0.0
    %94 = vmatprep.subr.mxu0 0.0
    %95 = vmatpush2.msra.mxu0 0.0
    %96 = vmatprep.subr.mxu0 0.0
    %97 = vmatpush2.msra.mxu0 0.0
    %98 = vmatprep.subr.mxu0 0.0
    %99 = vmatpush2.msra.mxu0 0.0
    %100 = vmatprep.subr.mxu0 0.0
    %101 = vmatpush2.msra.mxu0 0.0
    %102 = vmatprep.subr.mxu0 0.0
    %103 = vmatpush2.msra.mxu0 0.0
    %104 = vmatprep.subr.mxu0 0.0
    %105 = vmatpush2.msra.mxu0 0.0
    %106 = vmatprep.subr.mxu0 0.0
    %107 = vmatpush2.msra.mxu0 0.0
    %108 = vmatprep.subr.mxu0 0.0
    %109 = vmatpush2.msra.mxu0 0.0
    %110 = vmatprep.subr.mxu0 0.0
    %111 = vmatpush2.msra.mxu0 0.0
    %112 = vmatprep.subr.mxu0 0.0
    %113 = vmatpush2.msra.mxu0 0.0
    %114 = vmatprep.subr.mxu0 0.0
    %115 = vmatpush2.msra.mxu0 0.0
    %116 = vmatprep.subr.mxu0 0.0
    %117 = vmatpush2.msra.mxu0 0.0
    %118 = vmatprep.subr.mxu0 0.0
    %119 = vmatpush2.msra.mxu0 0.0
    %120 = vmatprep.subr.mxu0 0.0
    %121 = vmatpush2.msra.mxu0 0.0
    %122 = vmatprep.mubr.f32.mxu0 0.0
    %123 = vmatmul.mubr.f32.gmra.mxu0 %v56
    %v124 = vpop.f32.mrf.mxu0
    %v125 = vadd.f32 0.0, %v124
    %v126 = vpop.f32.mrf.mxu0
    %127 = vdwg.mxu0
    %128 = vst.msk [vmem:[#allocation2] sm:$0x3] %vm21, %v125
    // Predicated region
    $region18: #{_lambda_.7} parent=1 // pred_check
      _
    $region19: #{_lambda_.7} parent=1 // pred_check_branch
      %130 = sbr.rel (0) target = $region21
    $region20: #{_lambda_.7} parent=1 // pred_region
      %s132 = ssub.s32 32, 32
      %133 = vsyncadd [#allocation3], %s132
      %s135 = sshll.u32 [#allocation2], 4
      %s136 = int_to_ptr.vmem [resolvable:$true] %s135
      %138 = dma.vmem_to_hbm [thread:$0]  %s136, 32, %s4, [#allocation3]
    $region21: #{_lambda_.7} parent=1 // pred_fallthru
      _
    // Predicated region
    $region22: #{_lambda_.7} parent=1 // pred_check
      _
    $region23: #{_lambda_.7} parent=1 // pred_check_branch
      %140 = sbr.rel (0) target = $region25
    $region24: #{_lambda_.7} parent=1 // pred_region
      %141 = dma.done [#allocation3], 32
    $region25: #{_lambda_.7} parent=1 // pred_fallthru
      _
    %142 = vsyncpa [#allocation3], 1

// kernel: _lambda_.4
$region0: #{_lambda_.4}
  #allocation0 [shape = 'u32[]', space=smem, size = 0x4, offset = 0x4, fixed_abs, tag = 'smem constant byte address 0x4 - core index']
  #allocation1 [shape = 'u32[144,128]{1,0:T(1,128)}', space=vmem, size = 0x12000, scoped, tag = 'internal scratch']
  %s0 = inlined_call_operand.vmem [shape: f32[2,4,192], index: 0, kind: input, shape index: {}]
  %s1 = inlined_call_operand.vmem [shape: f32[192,32], index: 1, kind: input, shape index: {}]
  %s2 = inlined_call_operand.vmem [shape: f32[1,32], index: 2, kind: input, shape index: {}]
  %s3 = inlined_call_operand.vmem [shape: f32[4,32], index: 3, kind: input, shape index: {}]
  %s4 = inlined_call_operand.vmem [shape: f32[2,4,32], index: 4, kind: output, shape index: {}]
  %s5 = sld [smem:[#allocation0]]
  $region49: #{_lambda_.4} parent=0
    _
  %s7 = ssub.s32 1, %s5
  %s8 = scalar_select 0, %s7, %s5
  loop: start=0, step=1, limit=4
  $region2: #{_lambda_.4} parent=0 // loop_pre_header
    _
  $region3: #{_lambda_.4} parent=0 // loop_header
    %s10 = sphi 0, %s14
    %p11 = scmp.ge.s32.totalorder %s10, 4
    %s20 = sphi 0, %s22
    %s23 = sphi 0, %s20
    %s24 = sphi 0, %s23
    %s40 = sphi 0, %s24
    %s44 = sphi 0, %s44
    %s46 = sphi 0, %s44
    %s47 = sphi 0, %s46
    %s61 = sphi 0, %s47
    %s65 = sphi 0, %s65
    %s67 = sphi 0, %s65
    %s68 = sphi 0, %s67
    %s82 = sphi 0, %s68
    %s86 = sphi 0, %s86
    %s88 = sphi 0, %s86
    %s89 = sphi 0, %s88
    %s103 = sphi 0, %s89
    %s109 = sphi 0, %s111
    %s112 = sphi 0, %s109
    %s113 = sphi 0, %s112
    %s129 = sphi 0, %s113
  $region4: #{_lambda_.4} parent=0 // loop_header_branch
    %13 = sbr.rel (%p11) target = $region8
  $region5: #{_lambda_.4} parent=0 // loop_body
    %s15 = ssub.s32 %s10, 1
    %s16 = ssub.s32 %s10, 2
    %s17 = sadd.s32 %s10, 1
    %s18 = ssub.s32 %s10, %s17
    %p19 = scmp.eq.s32.totalorder %s18, 0
    %s21 = sadd.s32 %s20, 1
    %s22 = scalar_select %p19, %s20, %s21
    %p25 = pneg %p19
    %p26 = scmp.eq.s32.totalorder %s10, 1
    %p27 = por %p25, %p26
    %p28 = scmp.ne.s32.totalorder %s20, %s23
    %p29 = scmp.eq.s32.totalorder %s10, 0
    %p30 = por %p28, %p29
    %p31 = scmp.ne.s32.totalorder %s20, %s23
    %p32 = scmp.eq.s32.totalorder %s15, 1
    %p33 = por %p31, %p32
    %p34 = scmp.ne.s32.totalorder %s23, %s24
    %p35 = scmp.eq.s32.totalorder %s15, 0
    %p36 = por %p34, %p35
    %p37 = scmp.ne.s32.totalorder %s23, %s24
    %p38 = scmp.eq.s32.totalorder %s16, 1
    %p39 = por %p37, %p38
    %p41 = scmp.ne.s32.totalorder %s24, %s40
    %p42 = scmp.eq.s32.totalorder %s16, 0
    %p43 = por %p41, %p42
    %s45 = sadd.s32 %s44, 1
    %p48 = scmp.eq.s32.totalorder %s10, 1
    %p49 = scmp.ne.s32.totalorder %s44, %s46
    %p50 = scmp.eq.s32.totalorder %s10, 0
    %p51 = por %p49, %p50
    %p52 = scmp.ne.s32.totalorder %s44, %s46
    %p53 = scmp.eq.s32.totalorder %s15, 1
    %p54 = por %p52, %p53
    %p55 = scmp.ne.s32.totalorder %s46, %s47
    %p56 = scmp.eq.s32.totalorder %s15, 0
    %p57 = por %p55, %p56
    %p58 = scmp.ne.s32.totalorder %s46, %s47
    %p59 = scmp.eq.s32.totalorder %s16, 1
    %p60 = por %p58, %p59
    %p62 = scmp.ne.s32.totalorder %s47, %s61
    %p63 = scmp.eq.s32.totalorder %s16, 0
    %p64 = por %p62, %p63
    %s66 = sadd.s32 %s65, 1
    %p69 = scmp.eq.s32.totalorder %s10, 1
    %p70 = scmp.ne.s32.totalorder %s65, %s67
    %p71 = scmp.eq.s32.totalorder %s10, 0
    %p72 = por %p70, %p71
    %p73 = scmp.ne.s32.totalorder %s65, %s67
    %p74 = scmp.eq.s32.totalorder %s15, 1
    %p75 = por %p73, %p74
    %p76 = scmp.ne.s32.totalorder %s67, %s68
    %p77 = scmp.eq.s32.totalorder %s15, 0
    %p78 = por %p76, %p77
    %p79 = scmp.ne.s32.totalorder %s67, %s68
    %p80 = scmp.eq.s32.totalorder %s16, 1
    %p81 = por %p79, %p80
    %p83 = scmp.ne.s32.totalorder %s68, %s82
    %p84 = scmp.eq.s32.totalorder %s16, 0
    %p85 = por %p83, %p84
    %s87 = sadd.s32 %s86, 1
    %p90 = scmp.eq.s32.totalorder %s10, 1
    %p91 = scmp.ne.s32.totalorder %s86, %s88
    %p92 = scmp.eq.s32.totalorder %s10, 0
    %p93 = por %p91, %p92
    %p94 = scmp.ne.s32.totalorder %s86, %s88
    %p95 = scmp.eq.s32.totalorder %s15, 1
    %p96 = por %p94, %p95
    %p97 = scmp.ne.s32.totalorder %s88, %s89
    %p98 = scmp.eq.s32.totalorder %s15, 0
    %p99 = por %p97, %p98
    %p100 = scmp.ne.s32.totalorder %s88, %s89
    %p101 = scmp.eq.s32.totalorder %s16, 1
    %p102 = por %p100, %p101
    %p104 = scmp.ne.s32.totalorder %s89, %s103
    %p105 = scmp.eq.s32.totalorder %s16, 0
    %p106 = por %p104, %p105
    %s107 = ssub.s32 %s10, %s17
    %p108 = scmp.eq.s32.totalorder %s107, 0
    %s110 = sadd.s32 %s109, 1
    %s111 = scalar_select %p108, %s109, %s110
    %p114 = pneg %p108
    %p115 = scmp.eq.s32.totalorder %s10, 1
    %p116 = por %p114, %p115
    %p117 = scmp.ne.s32.totalorder %s109, %s112
    %p118 = scmp.eq.s32.totalorder %s10, 0
    %p119 = por %p117, %p118
    %p120 = scmp.ne.s32.totalorder %s109, %s112
    %p121 = scmp.eq.s32.totalorder %s15, 1
    %p122 = por %p120, %p121
    %p123 = scmp.ne.s32.totalorder %s112, %s113
    %p124 = scmp.eq.s32.totalorder %s15, 0
    %p125 = por %p123, %p124
    %p126 = scmp.ne.s32.totalorder %s112, %s113
    %p127 = scmp.eq.s32.totalorder %s16, 1
    %p128 = por %p126, %p127
    %p130 = scmp.ne.s32.totalorder %s113, %s129
    %p131 = scmp.eq.s32.totalorder %s16, 0
    %p132 = por %p130, %p131
    %p133 = scmp.le.s32.totalorder 1, %s10
    %p134 = scmp.lt.s32.totalorder %s10, 3
    %p135 = pnand %p133, %p134
    %p136 = pneg %p135
    // Predicated region
    $region9: #{_lambda_.4} parent=5 // pred_check
      _
    $region10: #{_lambda_.4} parent=5 // pred_check_branch
      %138 = sbr.rel (%p135) target = $region12
    $region11: #{_lambda_.4} parent=5 // pred_region
      %s139 = ssub.s32 %s10, 1
      // Predicated region
      $region13: #{_lambda_.4} parent=11 // pred_check
        %p140 = pneg %p57
      $region14: #{_lambda_.4} parent=11 // pred_check_branch
        %142 = sbr.rel (%p140) target = $region16
      $region15: #{_lambda_.4} parent=11 // pred_region
        _
      $region16: #{_lambda_.4} parent=11 // pred_fallthru
        _
      // Predicated region
      $region17: #{_lambda_.4} parent=11 // pred_check
        %p143 = pneg %p78
      $region18: #{_lambda_.4} parent=11 // pred_check_branch
        %145 = sbr.rel (%p143) target = $region20
      $region19: #{_lambda_.4} parent=11 // pred_region
        _
      $region20: #{_lambda_.4} parent=11 // pred_fallthru
        _
      // Predicated region
      $region21: #{_lambda_.4} parent=11 // pred_check
        %p146 = pneg %p99
      $region22: #{_lambda_.4} parent=11 // pred_check_branch
        %148 = sbr.rel (%p146) target = $region24
      $region23: #{_lambda_.4} parent=11 // pred_region
        _
      $region24: #{_lambda_.4} parent=11 // pred_fallthru
        _
    $region12: #{_lambda_.4} parent=5 // pred_fallthru
      _
    %p149 = scmp.lt.s32.totalorder %s10, 2
    // Predicated region
    $region25: #{_lambda_.4} parent=5 // pred_check
      %p150 = pneg %p149
    $region26: #{_lambda_.4} parent=5 // pred_check_branch
      %152 = sbr.rel (%p150) target = $region28
    $region27: #{_lambda_.4} parent=5 // pred_region
      // Predicated region
      $region29: #{_lambda_.4} parent=27 // pred_check
        %p153 = pneg %p30
      $region30: #{_lambda_.4} parent=27 // pred_check_branch
        %155 = sbr.rel (%p153) target = $region32
      $region31: #{_lambda_.4} parent=27 // pred_region
        %p156 = scmp.lt.s32.totalorder %s10, 1
        %s157 = scalar_select %p156, %s10, 1
        %s158 = smul.addr %s157, 2
        %s159 = smul.addr %s158, 4
        %s160 = scalar_lea.vmem %s0, %s159
      $region32: #{_lambda_.4} parent=27 // pred_fallthru
        _
    $region28: #{_lambda_.4} parent=5 // pred_fallthru
      _
    %p161 = scmp.le.s32.totalorder 1, %s10
    %p162 = scmp.lt.s32.totalorder %s10, 3
    %p163 = pnand %p161, %p162
    %p164 = pneg %p163
    // Predicated region
    $region33: #{_lambda_.4} parent=5 // pred_check
      _
    $region34: #{_lambda_.4} parent=5 // pred_check_branch
      %166 = sbr.rel (%p163) target = $region36
    $region35: #{_lambda_.4} parent=5 // pred_region
      %s167 = ssub.s32 %s10, 1
      %p168 = scmp.lt.s32.totalorder %s15, 1
      %s169 = scalar_select %p168, %s15, 1
      %s170 = smul.addr %s169, 2
      %s171 = smul.addr %s170, 4
      %s172 = scalar_lea.vmem %s0, %s171
      %p173 = pneg %p36
      %p174 = pneg %p33
      %p175 = pneg %p57
      %p176 = pneg %p54
      %p177 = pneg %p78
      %p178 = pneg %p75
      %p179 = pneg %p99
      %p180 = pneg %p96
      %p181 = pneg %p125
      %p182 = pneg %p122
      %p183 = scmp.lt.s32.totalorder %s15, 1
      %s184 = scalar_select %p183, %s15, 1
      %s185 = smul.addr %s184, 4
      %s186 = scalar_lea.vmem %s4, %s185
      %p187 = scmp.lt.s32.totalorder %s15, 1
      %s188 = scalar_select %p187, %s15, 1
      %s189 = smul.addr %s188, 2
      %s190 = smul.addr %s189, 4
      %s191 = scalar_lea.vmem %s0, %s190
      %p192 = scmp.lt.s32.totalorder %s15, 1
      %s193 = scalar_select %p192, %s15, 1
      %s194 = smul.addr %s193, 4
      %s195 = scalar_lea.vmem %s4, %s194
      %v196 = vld [vmem:[%s191] sm:$0xff]
      %v197 = vld [vmem:[%s1] sm:$0xff]
      %v198 = vld [vmem:[%s1 + $0x8] sm:$0xff]
      %v199 = vld [vmem:[%s1 + $0x10] sm:$0xff]
      %v200 = vld [vmem:[%s1 + $0x18] sm:$0xff]
      %v201 = vld [vmem:[%s1 + $0x20] sm:$0xff]
      %v202 = vld [vmem:[%s1 + $0x28] sm:$0xff]
      %v203 = vld [vmem:[%s1 + $0x30] sm:$0xff]
      %v204 = vld [vmem:[%s1 + $0x38] sm:$0xff]
      %v205 = vld [vmem:[%s1 + $0x40] sm:$0xff]
      %v206 = vld [vmem:[%s1 + $0x48] sm:$0xff]
      %v207 = vld [vmem:[%s1 + $0x50] sm:$0xff]
      %v208 = vld [vmem:[%s1 + $0x58] sm:$0xff]
      %v209 = vld [vmem:[%s1 + $0x60] sm:$0xff]
      %v210 = vld [vmem:[%s1 + $0x68] sm:$0xff]
      %v211 = vld [vmem:[%s1 + $0x70] sm:$0xff]
      %v212 = vld [vmem:[%s1 + $0x78] sm:$0xff]
      %v213 = vld [vmem:[%s1 + $0x80] sm:$0xff]
      %v214 = vld [vmem:[%s1 + $0x88] sm:$0xff]
      %v215 = vld [vmem:[%s1 + $0x90] sm:$0xff]
      %v216 = vld [vmem:[%s1 + $0x98] sm:$0xff]
      %v217 = vld [vmem:[%s1 + $0xa0] sm:$0xff]
      %v218 = vld [vmem:[%s1 + $0xa8] sm:$0xff]
      %v219 = vld [vmem:[%s1 + $0xb0] sm:$0xff]
      %v220 = vld [vmem:[%s1 + $0xb8] sm:$0xff]
      %v221 = vld [vmem:[%s2] sm:$0x1]
      %v223 = vlaneseq
      %v224 = vshrl.u32 %v223, 7
      %v225 = vsub.s32 0, %v224
      %v226 = vrot.slane %v221, %v225
      %v229 = vcombine.high %v196, %v196
      %vm230 = vcmask 523264
      %v231 = vsel %vm230, %v229, 0
      %233 = vmatprep.subr.mxu0 0.0
      %234 = vmatpush1.msra.mxu0 %v212
      %235 = vmatprep.subr.mxu0 0.0
      %236 = vmatpush1.msra.mxu0 %v211
      %237 = vmatprep.subr.mxu0 0.0
      %238 = vmatpush1.msra.mxu0 %v210
      %239 = vmatprep.subr.mxu0 0.0
      %240 = vmatpush1.msra.mxu0 %v209
      %241 = vmatprep.subr.mxu0 0.0
      %242 = vmatpush1.msra.mxu0 %v208
      %243 = vmatprep.subr.mxu0 0.0
      %244 = vmatpush1.msra.mxu0 %v207
      %245 = vmatprep.subr.mxu0 0.0
      %246 = vmatpush1.msra.mxu0 %v206
      %247 = vmatprep.subr.mxu0 0.0
      %248 = vmatpush1.msra.mxu0 %v205
      %249 = vmatprep.subr.mxu0 0.0
      %250 = vmatpush1.msra.mxu0 %v204
      %251 = vmatprep.subr.mxu0 0.0
      %252 = vmatpush1.msra.mxu0 %v203
      %253 = vmatprep.subr.mxu0 0.0
      %254 = vmatpush1.msra.mxu0 %v202
      %255 = vmatprep.subr.mxu0 0.0
      %256 = vmatpush1.msra.mxu0 %v201
      %257 = vmatprep.subr.mxu0 0.0
      %258 = vmatpush1.msra.mxu0 %v200
      %259 = vmatprep.subr.mxu0 0.0
      %260 = vmatpush1.msra.mxu0 %v199
      %261 = vmatprep.subr.mxu0 0.0
      %262 = vmatpush1.msra.mxu0 %v198
      %263 = vmatprep.subr.mxu0 0.0
      %264 = vmatpush1.msra.mxu0 %v197
      %265 = vmatprep.subr.mxu0 0.0
      %266 = vmatpush2.msra.mxu0 0.0
      %267 = vmatprep.subr.mxu0 0.0
      %268 = vmatpush2.msra.mxu0 0.0
      %269 = vmatprep.subr.mxu0 0.0
      %270 = vmatpush2.msra.mxu0 0.0
      %271 = vmatprep.subr.mxu0 0.0
      %272 = vmatpush2.msra.mxu0 0.0
      %273 = vmatprep.subr.mxu0 0.0
      %274 = vmatpush2.msra.mxu0 0.0
      %275 = vmatprep.subr.mxu0 0.0
      %276 = vmatpush2.msra.mxu0 0.0
      %277 = vmatprep.subr.mxu0 0.0
      %278 = vmatpush2.msra.mxu0 0.0
      %279 = vmatprep.subr.mxu0 0.0
      %280 = vmatpush2.msra.mxu0 0.0
      %281 = vmatprep.subr.mxu0 0.0
      %282 = vmatpush2.msra.mxu0 %v220
      %283 = vmatprep.subr.mxu0 0.0
      %284 = vmatpush2.msra.mxu0 %v219
      %285 = vmatprep.subr.mxu0 0.0
      %286 = vmatpush2.msra.mxu0 %v218
      %287 = vmatprep.subr.mxu0 0.0
      %288 = vmatpush2.msra.mxu0 %v217
      %289 = vmatprep.subr.mxu0 0.0
      %290 = vmatpush2.msra.mxu0 %v216
      %291 = vmatprep.subr.mxu0 0.0
      %292 = vmatpush2.msra.mxu0 %v215
      %293 = vmatprep.subr.mxu0 0.0
      %294 = vmatpush2.msra.mxu0 %v214
      %295 = vmatprep.subr.mxu0 0.0
      %296 = vmatpush2.msra.mxu0 %v213
      %297 = vmatprep.mubr.f32.mxu0 %v231
      %298 = vmatmul.mubr.f32.gmra.mxu0 %v196
      %v299 = vpop.f32.mrf.mxu0
      %v300 = vadd.f32 %v226, %v299
      %v301 = vpop.f32.mrf.mxu0
      %302 = vdwg.mxu0
      %v303 = vld [vmem:[%s3] sm:$0xf]
      %v304 = vadd.f32 %v300, %v303
      %vm305 = vcmask 257024
      %306 = vst.msk [vmem:[%s195] sm:$0xf] %vm305, %v304
      %p307 = scmp.lt.s32.totalorder %s15, 1
      %s308 = scalar_select %p307, %s15, 1
      %s309 = smul.addr %s308, 4
      %s310 = scalar_lea.vmem %s4, %s309
      // Predicated region
      $region37: #{_lambda_.4} parent=35 // pred_check
        %p311 = pneg %p122
      $region38: #{_lambda_.4} parent=35 // pred_check_branch
        %313 = sbr.rel (%p311) target = $region40
      $region39: #{_lambda_.4} parent=35 // pred_region
        _
      $region40: #{_lambda_.4} parent=35 // pred_fallthru
        _
    $region36: #{_lambda_.4} parent=5 // pred_fallthru
      _
    %p314 = scmp.le.s32.totalorder 2, %s10
    // Predicated region
    $region41: #{_lambda_.4} parent=5 // pred_check
      %p315 = pneg %p314
    $region42: #{_lambda_.4} parent=5 // pred_check_branch
      %317 = sbr.rel (%p315) target = $region44
    $region43: #{_lambda_.4} parent=5 // pred_region
      %s318 = ssub.s32 %s10, 2
      // Predicated region
      $region45: #{_lambda_.4} parent=43 // pred_check
        %p319 = pneg %p128
      $region46: #{_lambda_.4} parent=43 // pred_check_branch
        %321 = sbr.rel (%p319) target = $region48
      $region47: #{_lambda_.4} parent=43 // pred_region
        %p322 = scmp.lt.s32.totalorder %s16, 1
        %s323 = scalar_select %p322, %s16, 1
        %s324 = smul.addr %s323, 4
        %s325 = scalar_lea.vmem %s4, %s324
      $region48: #{_lambda_.4} parent=43 // pred_fallthru
        _
    $region44: #{_lambda_.4} parent=5 // pred_fallthru
      _
  $region6: #{_lambda_.4} parent=0 // loop_footer
    %s14 = sadd.s32 1, %s10
  $region7: #{_lambda_.4} parent=0 // loop_footer_branch
    %9 = sbr.rel target = $region3
  $region8: #{_lambda_.4} parent=0 // loop_exit
    _

// kernel: _lambda_.5
$region0: #{_lambda_.5}
  #allocation0 [shape = 'u32[]', space=smem, size = 0x4, offset = 0x4, fixed_abs, tag = 'smem constant byte address 0x4 - core index']
  #allocation1 [shape = 'u32[144,128]{1,0:T(1,128)}', space=vmem, size = 0x12000, scoped, tag = 'internal scratch']
  %s0 = inlined_call_operand.vmem [shape: f32[2,5,32], index: 0, kind: input, shape index: {}]
  %s1 = inlined_call_operand.vmem [shape: f32[1,32], index: 1, kind: input, shape index: {}, may-alias: {1,7}]
  %s2 = inlined_call_operand.vmem [shape: f32[1,32], index: 2, kind: input, shape index: {}, may-alias: {2,6,8,12}]
  %s3 = inlined_call_operand.vmem [shape: f32[32,128], index: 3, kind: input, shape index: {}]
  %s4 = inlined_call_operand.vmem [shape: f32[1,128], index: 4, kind: input, shape index: {}, may-alias: {4,10}]
  %s5 = inlined_call_operand.vmem [shape: f32[32,32], index: 5, kind: input, shape index: {}]
  %s6 = inlined_call_operand.vmem [shape: f32[1,32], index: 6, kind: input, shape index: {}, may-alias: {2,6,8,12}]
  %s7 = inlined_call_operand.vmem [shape: f32[1,32], index: 7, kind: input, shape index: {}, may-alias: {1,7}]
  %s8 = inlined_call_operand.vmem [shape: f32[1,32], index: 8, kind: input, shape index: {}, may-alias: {2,6,8,12}]
  %s9 = inlined_call_operand.vmem [shape: f32[32,128], index: 9, kind: input, shape index: {}]
  %s10 = inlined_call_operand.vmem [shape: f32[1,128], index: 10, kind: input, shape index: {}, may-alias: {4,10}]
  %s11 = inlined_call_operand.vmem [shape: f32[128,32], index: 11, kind: input, shape index: {}]
  %s12 = inlined_call_operand.vmem [shape: f32[1,32], index: 12, kind: input, shape index: {}, may-alias: {2,6,8,12}]
  %s13 = inlined_call_operand.vmem [shape: f32[2,5,32], index: 13, kind: output, shape index: {}]
  %s14 = sld [smem:[#allocation0]]
  $region85: #{_lambda_.5} parent=0
    _
  %s16 = ssub.s32 1, %s14
  %s17 = scalar_select 0, %s16, %s14
  loop: start=0, step=1, limit=4
  $region2: #{_lambda_.5} parent=0 // loop_pre_header
    _
  $region3: #{_lambda_.5} parent=0 // loop_header
    %s19 = sphi 0, %s23
    %p20 = scmp.ge.s32.totalorder %s19, 4
    %s29 = sphi 0, %s31
    %s32 = sphi 0, %s29
    %s33 = sphi 0, %s32
    %s49 = sphi 0, %s33
    %s53 = sphi 0, %s53
    %s55 = sphi 0, %s53
    %s56 = sphi 0, %s55
    %s70 = sphi 0, %s56
    %s74 = sphi 0, %s74
    %s76 = sphi 0, %s74
    %s77 = sphi 0, %s76
    %s91 = sphi 0, %s77
    %s95 = sphi 0, %s95
    %s97 = sphi 0, %s95
    %s98 = sphi 0, %s97
    %s112 = sphi 0, %s98
    %s116 = sphi 0, %s116
    %s118 = sphi 0, %s116
    %s119 = sphi 0, %s118
    %s133 = sphi 0, %s119
    %s137 = sphi 0, %s137
    %s139 = sphi 0, %s137
    %s140 = sphi 0, %s139
    %s154 = sphi 0, %s140
    %s158 = sphi 0, %s158
    %s160 = sphi 0, %s158
    %s161 = sphi 0, %s160
    %s175 = sphi 0, %s161
    %s179 = sphi 0, %s179
    %s181 = sphi 0, %s179
    %s182 = sphi 0, %s181
    %s196 = sphi 0, %s182
    %s200 = sphi 0, %s200
    %s202 = sphi 0, %s200
    %s203 = sphi 0, %s202
    %s217 = sphi 0, %s203
    %s221 = sphi 0, %s221
    %s223 = sphi 0, %s221
    %s224 = sphi 0, %s223
    %s238 = sphi 0, %s224
    %s242 = sphi 0, %s242
    %s244 = sphi 0, %s242
    %s245 = sphi 0, %s244
    %s259 = sphi 0, %s245
    %s263 = sphi 0, %s263
    %s265 = sphi 0, %s263
    %s266 = sphi 0, %s265
    %s280 = sphi 0, %s266
    %s284 = sphi 0, %s284
    %s286 = sphi 0, %s284
    %s287 = sphi 0, %s286
    %s301 = sphi 0, %s287
    %s307 = sphi 0, %s309
    %s310 = sphi 0, %s307
    %s311 = sphi 0, %s310
    %s327 = sphi 0, %s311
  $region4: #{_lambda_.5} parent=0 // loop_header_branch
    %22 = sbr.rel (%p20) target = $region8
  $region5: #{_lambda_.5} parent=0 // loop_body
    %s24 = ssub.s32 %s19, 1
    %s25 = ssub.s32 %s19, 2
    %s26 = sadd.s32 %s19, 1
    %s27 = ssub.s32 %s19, %s26
    %p28 = scmp.eq.s32.totalorder %s27, 0
    %s30 = sadd.s32 %s29, 1
    %s31 = scalar_select %p28, %s29, %s30
    %p34 = pneg %p28
    %p35 = scmp.eq.s32.totalorder %s19, 1
    %p36 = por %p34, %p35
    %p37 = scmp.ne.s32.totalorder %s29, %s32
    %p38 = scmp.eq.s32.totalorder %s19, 0
    %p39 = por %p37, %p38
    %p40 = scmp.ne.s32.totalorder %s29, %s32
    %p41 = scmp.eq.s32.totalorder %s24, 1
    %p42 = por %p40, %p41
    %p43 = scmp.ne.s32.totalorder %s32, %s33
    %p44 = scmp.eq.s32.totalorder %s24, 0
    %p45 = por %p43, %p44
    %p46 = scmp.ne.s32.totalorder %s32, %s33
    %p47 = scmp.eq.s32.totalorder %s25, 1
    %p48 = por %p46, %p47
    %p50 = scmp.ne.s32.totalorder %s33, %s49
    %p51 = scmp.eq.s32.totalorder %s25, 0
    %p52 = por %p50, %p51
    %s54 = sadd.s32 %s53, 1
    %p57 = scmp.eq.s32.totalorder %s19, 1
    %p58 = scmp.ne.s32.totalorder %s53, %s55
    %p59 = scmp.eq.s32.totalorder %s19, 0
    %p60 = por %p58, %p59
    %p61 = scmp.ne.s32.totalorder %s53, %s55
    %p62 = scmp.eq.s32.totalorder %s24, 1
    %p63 = por %p61, %p62
    %p64 = scmp.ne.s32.totalorder %s55, %s56
    %p65 = scmp.eq.s32.totalorder %s24, 0
    %p66 = por %p64, %p65
    %p67 = scmp.ne.s32.totalorder %s55, %s56
    %p68 = scmp.eq.s32.totalorder %s25, 1
    %p69 = por %p67, %p68
    %p71 = scmp.ne.s32.totalorder %s56, %s70
    %p72 = scmp.eq.s32.totalorder %s25, 0
    %p73 = por %p71, %p72
    %s75 = sadd.s32 %s74, 1
    %p78 = scmp.eq.s32.totalorder %s19, 1
    %p79 = scmp.ne.s32.totalorder %s74, %s76
    %p80 = scmp.eq.s32.totalorder %s19, 0
    %p81 = por %p79, %p80
    %p82 = scmp.ne.s32.totalorder %s74, %s76
    %p83 = scmp.eq.s32.totalorder %s24, 1
    %p84 = por %p82, %p83
    %p85 = scmp.ne.s32.totalorder %s76, %s77
    %p86 = scmp.eq.s32.totalorder %s24, 0
    %p87 = por %p85, %p86
    %p88 = scmp.ne.s32.totalorder %s76, %s77
    %p89 = scmp.eq.s32.totalorder %s25, 1
    %p90 = por %p88, %p89
    %p92 = scmp.ne.s32.totalorder %s77, %s91
    %p93 = scmp.eq.s32.totalorder %s25, 0
    %p94 = por %p92, %p93
    %s96 = sadd.s32 %s95, 1
    %p99 = scmp.eq.s32.totalorder %s19, 1
    %p100 = scmp.ne.s32.totalorder %s95, %s97
    %p101 = scmp.eq.s32.totalorder %s19, 0
    %p102 = por %p100, %p101
    %p103 = scmp.ne.s32.totalorder %s95, %s97
    %p104 = scmp.eq.s32.totalorder %s24, 1
    %p105 = por %p103, %p104
    %p106 = scmp.ne.s32.totalorder %s97, %s98
    %p107 = scmp.eq.s32.totalorder %s24, 0
    %p108 = por %p106, %p107
    %p109 = scmp.ne.s32.totalorder %s97, %s98
    %p110 = scmp.eq.s32.totalorder %s25, 1
    %p111 = por %p109, %p110
    %p113 = scmp.ne.s32.totalorder %s98, %s112
    %p114 = scmp.eq.s32.totalorder %s25, 0
    %p115 = por %p113, %p114
    %s117 = sadd.s32 %s116, 1
    %p120 = scmp.eq.s32.totalorder %s19, 1
    %p121 = scmp.ne.s32.totalorder %s116, %s118
    %p122 = scmp.eq.s32.totalorder %s19, 0
    %p123 = por %p121, %p122
    %p124 = scmp.ne.s32.totalorder %s116, %s118
    %p125 = scmp.eq.s32.totalorder %s24, 1
    %p126 = por %p124, %p125
    %p127 = scmp.ne.s32.totalorder %s118, %s119
    %p128 = scmp.eq.s32.totalorder %s24, 0
    %p129 = por %p127, %p128
    %p130 = scmp.ne.s32.totalorder %s118, %s119
    %p131 = scmp.eq.s32.totalorder %s25, 1
    %p132 = por %p130, %p131
    %p134 = scmp.ne.s32.totalorder %s119, %s133
    %p135 = scmp.eq.s32.totalorder %s25, 0
    %p136 = por %p134, %p135
    %s138 = sadd.s32 %s137, 1
    %p141 = scmp.eq.s32.totalorder %s19, 1
    %p142 = scmp.ne.s32.totalorder %s137, %s139
    %p143 = scmp.eq.s32.totalorder %s19, 0
    %p144 = por %p142, %p143
    %p145 = scmp.ne.s32.totalorder %s137, %s139
    %p146 = scmp.eq.s32.totalorder %s24, 1
    %p147 = por %p145, %p146
    %p148 = scmp.ne.s32.totalorder %s139, %s140
    %p149 = scmp.eq.s32.totalorder %s24, 0
    %p150 = por %p148, %p149
    %p151 = scmp.ne.s32.totalorder %s139, %s140
    %p152 = scmp.eq.s32.totalorder %s25, 1
    %p153 = por %p151, %p152
    %p155 = scmp.ne.s32.totalorder %s140, %s154
    %p156 = scmp.eq.s32.totalorder %s25, 0
    %p157 = por %p155, %p156
    %s159 = sadd.s32 %s158, 1
    %p162 = scmp.eq.s32.totalorder %s19, 1
    %p163 = scmp.ne.s32.totalorder %s158, %s160
    %p164 = scmp.eq.s32.totalorder %s19, 0
    %p165 = por %p163, %p164
    %p166 = scmp.ne.s32.totalorder %s158, %s160
    %p167 = scmp.eq.s32.totalorder %s24, 1
    %p168 = por %p166, %p167
    %p169 = scmp.ne.s32.totalorder %s160, %s161
    %p170 = scmp.eq.s32.totalorder %s24, 0
    %p171 = por %p169, %p170
    %p172 = scmp.ne.s32.totalorder %s160, %s161
    %p173 = scmp.eq.s32.totalorder %s25, 1
    %p174 = por %p172, %p173
    %p176 = scmp.ne.s32.totalorder %s161, %s175
    %p177 = scmp.eq.s32.totalorder %s25, 0
    %p178 = por %p176, %p177
    %s180 = sadd.s32 %s179, 1
    %p183 = scmp.eq.s32.totalorder %s19, 1
    %p184 = scmp.ne.s32.totalorder %s179, %s181
    %p185 = scmp.eq.s32.totalorder %s19, 0
    %p186 = por %p184, %p185
    %p187 = scmp.ne.s32.totalorder %s179, %s181
    %p188 = scmp.eq.s32.totalorder %s24, 1
    %p189 = por %p187, %p188
    %p190 = scmp.ne.s32.totalorder %s181, %s182
    %p191 = scmp.eq.s32.totalorder %s24, 0
    %p192 = por %p190, %p191
    %p193 = scmp.ne.s32.totalorder %s181, %s182
    %p194 = scmp.eq.s32.totalorder %s25, 1
    %p195 = por %p193, %p194
    %p197 = scmp.ne.s32.totalorder %s182, %s196
    %p198 = scmp.eq.s32.totalorder %s25, 0
    %p199 = por %p197, %p198
    %s201 = sadd.s32 %s200, 1
    %p204 = scmp.eq.s32.totalorder %s19, 1
    %p205 = scmp.ne.s32.totalorder %s200, %s202
    %p206 = scmp.eq.s32.totalorder %s19, 0
    %p207 = por %p205, %p206
    %p208 = scmp.ne.s32.totalorder %s200, %s202
    %p209 = scmp.eq.s32.totalorder %s24, 1
    %p210 = por %p208, %p209
    %p211 = scmp.ne.s32.totalorder %s202, %s203
    %p212 = scmp.eq.s32.totalorder %s24, 0
    %p213 = por %p211, %p212
    %p214 = scmp.ne.s32.totalorder %s202, %s203
    %p215 = scmp.eq.s32.totalorder %s25, 1
    %p216 = por %p214, %p215
    %p218 = scmp.ne.s32.totalorder %s203, %s217
    %p219 = scmp.eq.s32.totalorder %s25, 0
    %p220 = por %p218, %p219
    %s222 = sadd.s32 %s221, 1
    %p225 = scmp.eq.s32.totalorder %s19, 1
    %p226 = scmp.ne.s32.totalorder %s221, %s223
    %p227 = scmp.eq.s32.totalorder %s19, 0
    %p228 = por %p226, %p227
    %p229 = scmp.ne.s32.totalorder %s221, %s223
    %p230 = scmp.eq.s32.totalorder %s24, 1
    %p231 = por %p229, %p230
    %p232 = scmp.ne.s32.totalorder %s223, %s224
    %p233 = scmp.eq.s32.totalorder %s24, 0
    %p234 = por %p232, %p233
    %p235 = scmp.ne.s32.totalorder %s223, %s224
    %p236 = scmp.eq.s32.totalorder %s25, 1
    %p237 = por %p235, %p236
    %p239 = scmp.ne.s32.totalorder %s224, %s238
    %p240 = scmp.eq.s32.totalorder %s25, 0
    %p241 = por %p239, %p240
    %s243 = sadd.s32 %s242, 1
    %p246 = scmp.eq.s32.totalorder %s19, 1
    %p247 = scmp.ne.s32.totalorder %s242, %s244
    %p248 = scmp.eq.s32.totalorder %s19, 0
    %p249 = por %p247, %p248
    %p250 = scmp.ne.s32.totalorder %s242, %s244
    %p251 = scmp.eq.s32.totalorder %s24, 1
    %p252 = por %p250, %p251
    %p253 = scmp.ne.s32.totalorder %s244, %s245
    %p254 = scmp.eq.s32.totalorder %s24, 0
    %p255 = por %p253, %p254
    %p256 = scmp.ne.s32.totalorder %s244, %s245
    %p257 = scmp.eq.s32.totalorder %s25, 1
    %p258 = por %p256, %p257
    %p260 = scmp.ne.s32.totalorder %s245, %s259
    %p261 = scmp.eq.s32.totalorder %s25, 0
    %p262 = por %p260, %p261
    %s264 = sadd.s32 %s263, 1
    %p267 = scmp.eq.s32.totalorder %s19, 1
    %p268 = scmp.ne.s32.totalorder %s263, %s265
    %p269 = scmp.eq.s32.totalorder %s19, 0
    %p270 = por %p268, %p269
    %p271 = scmp.ne.s32.totalorder %s263, %s265
    %p272 = scmp.eq.s32.totalorder %s24, 1
    %p273 = por %p271, %p272
    %p274 = scmp.ne.s32.totalorder %s265, %s266
    %p275 = scmp.eq.s32.totalorder %s24, 0
    %p276 = por %p274, %p275
    %p277 = scmp.ne.s32.totalorder %s265, %s266
    %p278 = scmp.eq.s32.totalorder %s25, 1
    %p279 = por %p277, %p278
    %p281 = scmp.ne.s32.totalorder %s266, %s280
    %p282 = scmp.eq.s32.totalorder %s25, 0
    %p283 = por %p281, %p282
    %s285 = sadd.s32 %s284, 1
    %p288 = scmp.eq.s32.totalorder %s19, 1
    %p289 = scmp.ne.s32.totalorder %s284, %s286
    %p290 = scmp.eq.s32.totalorder %s19, 0
    %p291 = por %p289, %p290
    %p292 = scmp.ne.s32.totalorder %s284, %s286
    %p293 = scmp.eq.s32.totalorder %s24, 1
    %p294 = por %p292, %p293
    %p295 = scmp.ne.s32.totalorder %s286, %s287
    %p296 = scmp.eq.s32.totalorder %s24, 0
    %p297 = por %p295, %p296
    %p298 = scmp.ne.s32.totalorder %s286, %s287
    %p299 = scmp.eq.s32.totalorder %s25, 1
    %p300 = por %p298, %p299
    %p302 = scmp.ne.s32.totalorder %s287, %s301
    %p303 = scmp.eq.s32.totalorder %s25, 0
    %p304 = por %p302, %p303
    %s305 = ssub.s32 %s19, %s26
    %p306 = scmp.eq.s32.totalorder %s305, 0
    %s308 = sadd.s32 %s307, 1
    %s309 = scalar_select %p306, %s307, %s308
    %p312 = pneg %p306
    %p313 = scmp.eq.s32.totalorder %s19, 1
    %p314 = por %p312, %p313
    %p315 = scmp.ne.s32.totalorder %s307, %s310
    %p316 = scmp.eq.s32.totalorder %s19, 0
    %p317 = por %p315, %p316
    %p318 = scmp.ne.s32.totalorder %s307, %s310
    %p319 = scmp.eq.s32.totalorder %s24, 1
    %p320 = por %p318, %p319
    %p321 = scmp.ne.s32.totalorder %s310, %s311
    %p322 = scmp.eq.s32.totalorder %s24, 0
    %p323 = por %p321, %p322
    %p324 = scmp.ne.s32.totalorder %s310, %s311
    %p325 = scmp.eq.s32.totalorder %s25, 1
    %p326 = por %p324, %p325
    %p328 = scmp.ne.s32.totalorder %s311, %s327
    %p329 = scmp.eq.s32.totalorder %s25, 0
    %p330 = por %p328, %p329
    %p331 = scmp.le.s32.totalorder 1, %s19
    %p332 = scmp.lt.s32.totalorder %s19, 3
    %p333 = pnand %p331, %p332
    %p334 = pneg %p333
    // Predicated region
    $region9: #{_lambda_.5} parent=5 // pred_check
      _
    $region10: #{_lambda_.5} parent=5 // pred_check_branch
      %336 = sbr.rel (%p333) target = $region12
    $region11: #{_lambda_.5} parent=5 // pred_region
      %s337 = ssub.s32 %s19, 1
      // Predicated region
      $region13: #{_lambda_.5} parent=11 // pred_check
        %p338 = pneg %p66
      $region14: #{_lambda_.5} parent=11 // pred_check_branch
        %340 = sbr.rel (%p338) target = $region16
      $region15: #{_lambda_.5} parent=11 // pred_region
        _
      $region16: #{_lambda_.5} parent=11 // pred_fallthru
        _
      // Predicated region
      $region17: #{_lambda_.5} parent=11 // pred_check
        %p341 = pneg %p87
      $region18: #{_lambda_.5} parent=11 // pred_check_branch
        %343 = sbr.rel (%p341) target = $region20
      $region19: #{_lambda_.5} parent=11 // pred_region
        _
      $region20: #{_lambda_.5} parent=11 // pred_fallthru
        _
      // Predicated region
      $region21: #{_lambda_.5} parent=11 // pred_check
        %p344 = pneg %p108
      $region22: #{_lambda_.5} parent=11 // pred_check_branch
        %346 = sbr.rel (%p344) target = $region24
      $region23: #{_lambda_.5} parent=11 // pred_region
        _
      $region24: #{_lambda_.5} parent=11 // pred_fallthru
        _
      // Predicated region
      $region25: #{_lambda_.5} parent=11 // pred_check
        %p347 = pneg %p129
      $region26: #{_lambda_.5} parent=11 // pred_check_branch
        %349 = sbr.rel (%p347) target = $region28
      $region27: #{_lambda_.5} parent=11 // pred_region
        _
      $region28: #{_lambda_.5} parent=11 // pred_fallthru
        _
      // Predicated region
      $region29: #{_lambda_.5} parent=11 // pred_check
        %p350 = pneg %p150
      $region30: #{_lambda_.5} parent=11 // pred_check_branch
        %352 = sbr.rel (%p350) target = $region32
      $region31: #{_lambda_.5} parent=11 // pred_region
        _
      $region32: #{_lambda_.5} parent=11 // pred_fallthru
        _
      // Predicated region
      $region33: #{_lambda_.5} parent=11 // pred_check
        %p353 = pneg %p171
      $region34: #{_lambda_.5} parent=11 // pred_check_branch
        %355 = sbr.rel (%p353) target = $region36
      $region35: #{_lambda_.5} parent=11 // pred_region
        _
      $region36: #{_lambda_.5} parent=11 // pred_fallthru
        _
      // Predicated region
      $region37: #{_lambda_.5} parent=11 // pred_check
        %p356 = pneg %p192
      $region38: #{_lambda_.5} parent=11 // pred_check_branch
        %358 = sbr.rel (%p356) target = $region40
      $region39: #{_lambda_.5} parent=11 // pred_region
        _
      $region40: #{_lambda_.5} parent=11 // pred_fallthru
        _
      // Predicated region
      $region41: #{_lambda_.5} parent=11 // pred_check
        %p359 = pneg %p213
      $region42: #{_lambda_.5} parent=11 // pred_check_branch
        %361 = sbr.rel (%p359) target = $region44
      $region43: #{_lambda_.5} parent=11 // pred_region
        _
      $region44: #{_lambda_.5} parent=11 // pred_fallthru
        _
      // Predicated region
      $region45: #{_lambda_.5} parent=11 // pred_check
        %p362 = pneg %p234
      $region46: #{_lambda_.5} parent=11 // pred_check_branch
        %364 = sbr.rel (%p362) target = $region48
      $region47: #{_lambda_.5} parent=11 // pred_region
        _
      $region48: #{_lambda_.5} parent=11 // pred_fallthru
        _
      // Predicated region
      $region49: #{_lambda_.5} parent=11 // pred_check
        %p365 = pneg %p255
      $region50: #{_lambda_.5} parent=11 // pred_check_branch
        %367 = sbr.rel (%p365) target = $region52
      $region51: #{_lambda_.5} parent=11 // pred_region
        _
      $region52: #{_lambda_.5} parent=11 // pred_fallthru
        _
      // Predicated region
      $region53: #{_lambda_.5} parent=11 // pred_check
        %p368 = pneg %p276
      $region54: #{_lambda_.5} parent=11 // pred_check_branch
        %370 = sbr.rel (%p368) target = $region56
      $region55: #{_lambda_.5} parent=11 // pred_region
        _
      $region56: #{_lambda_.5} parent=11 // pred_fallthru
        _
      // Predicated region
      $region57: #{_lambda_.5} parent=11 // pred_check
        %p371 = pneg %p297
      $region58: #{_lambda_.5} parent=11 // pred_check_branch
        %373 = sbr.rel (%p371) target = $region60
      $region59: #{_lambda_.5} parent=11 // pred_region
        _
      $region60: #{_lambda_.5} parent=11 // pred_fallthru
        _
    $region12: #{_lambda_.5} parent=5 // pred_fallthru
      _
    %p374 = scmp.lt.s32.totalorder %s19, 2
    // Predicated region
    $region61: #{_lambda_.5} parent=5 // pred_check
      %p375 = pneg %p374
    $region62: #{_lambda_.5} parent=5 // pred_check_branch
      %377 = sbr.rel (%p375) target = $region64
    $region63: #{_lambda_.5} parent=5 // pred_region
      // Predicated region
      $region65: #{_lambda_.5} parent=63 // pred_check
        %p378 = pneg %p39
      $region66: #{_lambda_.5} parent=63 // pred_check_branch
        %380 = sbr.rel (%p378) target = $region68
      $region67: #{_lambda_.5} parent=63 // pred_region
        %p381 = scmp.lt.s32.totalorder %s19, 1
        %s382 = scalar_select %p381, %s19, 1
        %s383 = smul.addr %s382, 8
        %s384 = scalar_lea.vmem %s0, %s383
      $region68: #{_lambda_.5} parent=63 // pred_fallthru
        _
    $region64: #{_lambda_.5} parent=5 // pred_fallthru
      _
    %p385 = scmp.le.s32.totalorder 1, %s19
    %p386 = scmp.lt.s32.totalorder %s19, 3
    %p387 = pnand %p385, %p386
    %p388 = pneg %p387
    // Predicated region
    $region69: #{_lambda_.5} parent=5 // pred_check
      _
    $region70: #{_lambda_.5} parent=5 // pred_check_branch
      %390 = sbr.rel (%p387) target = $region72
    $region71: #{_lambda_.5} parent=5 // pred_region
      %s391 = ssub.s32 %s19, 1
      %p392 = scmp.lt.s32.totalorder %s24, 1
      %s393 = scalar_select %p392, %s24, 1
      %s394 = smul.addr %s393, 8
      %s395 = scalar_lea.vmem %s0, %s394
      %p396 = pneg %p45
      %p397 = pneg %p42
      %p398 = pneg %p66
      %p399 = pneg %p63
      %p400 = pneg %p87
      %p401 = pneg %p84
      %p402 = pneg %p108
      %p403 = pneg %p105
      %p404 = pneg %p129
      %p405 = pneg %p126
      %p406 = pneg %p150
      %p407 = pneg %p147
      %p408 = pneg %p171
      %p409 = pneg %p168
      %p410 = pneg %p192
      %p411 = pneg %p189
      %p412 = pneg %p213
      %p413 = pneg %p210
      %p414 = pneg %p234
      %p415 = pneg %p231
      %p416 = pneg %p255
      %p417 = pneg %p252
      %p418 = pneg %p276
      %p419 = pneg %p273
      %p420 = pneg %p297
      %p421 = pneg %p294
      %p422 = pneg %p323
      %p423 = pneg %p320
      %p424 = scmp.lt.s32.totalorder %s24, 1
      %s425 = scalar_select %p424, %s24, 1
      %s426 = smul.addr %s425, 8
      %s427 = scalar_lea.vmem %s13, %s426
      %p428 = scmp.lt.s32.totalorder %s24, 1
      %s429 = scalar_select %p428, %s24, 1
      %s430 = smul.addr %s429, 8
      %s431 = scalar_lea.vmem %s0, %s430
      %p432 = scmp.lt.s32.totalorder %s24, 1
      %s433 = scalar_select %p432, %s24, 1
      %s434 = smul.addr %s433, 8
      %s435 = scalar_lea.vmem %s13, %s434
      %v436 = vld [vmem:[%s431] sm:$0x1f]
      %v437 = vld [vmem:[%s1] sm:$0x1]
      %v438 = vld [vmem:[%s2] sm:$0x1]
      %vm439 = vcmask 258048
      %v440 = vsel %vm439, %v436, 0.0
      %441 = vadd.xlane.f32.xlu0 %v440
      %v442 = vpop.xlane.xlu0 %441
      %v443 = vrcp.pop 32.0
      %v444 = vmul.f32 %v442, %v443
      %v445 = vsub.f32 %v436, %v444
      %v446 = vmul.f32 %v445, %v445
      %v447 = vsel %vm439, %v446, 0.0
      %448 = vadd.xlane.f32.xlu0 %v447
      %v449 = vpop.xlane.xlu0 %448
      %v450 = vmul.f32 %v449, %v443
      %v451 = vadd.f32 %v450, 1e-05
      %v452 = vrsqrt.pop %v451
      %v453 = vmul.f32 %v445, %v452
      %v455 = vlaneseq
      %v456 = vshrl.u32 %v455, 7
      %v457 = vsub.s32 0, %v456
      %v458 = vrot.slane %v437, %v457
      %v460 = vmul.f32 %v453, %v458
      %v462 = vlaneseq
      %v463 = vshrl.u32 %v462, 7
      %v464 = vsub.s32 0, %v463
      %v465 = vrot.slane %v438, %v464
      %v467 = vadd.f32 %v460, %v465
      %v468 = vld [vmem:[%s3] sm:$0xff]
      %v469 = vld [vmem:[%s3 + $0x8] sm:$0xff]
      %v470 = vld [vmem:[%s3 + $0x10] sm:$0xff]
      %v471 = vld [vmem:[%s3 + $0x18] sm:$0xff]
      %v472 = vld [vmem:[%s4] sm:$0x1]
      %v474 = vlaneseq
      %v475 = vshrl.u32 %v474, 7
      %v476 = vsub.s32 0, %v475
      %v477 = vrot.slane %v472, %v476
      %vm479 = vcmask 261120
      %v481 = vsel %vm479, %v467, 0
      %483 = vmatprep.subr.mxu0 0.0
      %484 = vmatpush1.msra.mxu0 0.0
      %485 = vmatprep.subr.mxu0 0.0
      %486 = vmatpush1.msra.mxu0 0.0
      %487 = vmatprep.subr.mxu0 0.0
      %488 = vmatpush1.msra.mxu0 0.0
      %489 = vmatprep.subr.mxu0 0.0
      %490 = vmatpush1.msra.mxu0 0.0
      %491 = vmatprep.subr.mxu0 0.0
      %492 = vmatpush1.msra.mxu0 0.0
      %493 = vmatprep.subr.mxu0 0.0
      %494 = vmatpush1.msra.mxu0 0.0
      %495 = vmatprep.subr.mxu0 0.0
      %496 = vmatpush1.msra.mxu0 0.0
      %497 = vmatprep.subr.mxu0 0.0
      %498 = vmatpush1.msra.mxu0 0.0
      %499 = vmatprep.subr.mxu0 0.0
      %500 = vmatpush1.msra.mxu0 0.0
      %501 = vmatprep.subr.mxu0 0.0
      %502 = vmatpush1.msra.mxu0 0.0
      %503 = vmatprep.subr.mxu0 0.0
      %504 = vmatpush1.msra.mxu0 0.0
      %505 = vmatprep.subr.mxu0 0.0
      %506 = vmatpush1.msra.mxu0 0.0
      %507 = vmatprep.subr.mxu0 0.0
      %508 = vmatpush1.msra.mxu0 %v471
      %509 = vmatprep.subr.mxu0 0.0
      %510 = vmatpush1.msra.mxu0 %v470
      %511 = vmatprep.subr.mxu0 0.0
      %512 = vmatpush1.msra.mxu0 %v469
      %513 = vmatprep.subr.mxu0 0.0
      %514 = vmatpush1.msra.mxu0 %v468
      %515 = vmatprep.subr.mxu0 0.0
      %516 = vmatpush2.msra.mxu0 0.0
      %517 = vmatprep.subr.mxu0 0.0
      %518 = vmatpush2.msra.mxu0 0.0
      %519 = vmatprep.subr.mxu0 0.0
      %520 = vmatpush2.msra.mxu0 0.0
      %521 = vmatprep.subr.mxu0 0.0
      %522 = vmatpush2.msra.mxu0 0.0
      %523 = vmatprep.subr.mxu0 0.0
      %524 = vmatpush2.msra.mxu0 0.0
      %525 = vmatprep.subr.mxu0 0.0
      %526 = vmatpush2.msra.mxu0 0.0
      %527 = vmatprep.subr.mxu0 0.0
      %528 = vmatpush2.msra.mxu0 0.0
      %529 = vmatprep.subr.mxu0 0.0
      %530 = vmatpush2.msra.mxu0 0.0
      %531 = vmatprep.subr.mxu0 0.0
      %532 = vmatpush2.msra.mxu0 0.0
      %533 = vmatprep.subr.mxu0 0.0
      %534 = vmatpush2.msra.mxu0 0.0
      %535 = vmatprep.subr.mxu0 0.0
      %536 = vmatpush2.msra.mxu0 0.0
      %537 = vmatprep.subr.mxu0 0.0
      %538 = vmatpush2.msra.mxu0 0.0
      %539 = vmatprep.subr.mxu0 0.0
      %540 = vmatpush2.msra.mxu0 0.0
      %541 = vmatprep.subr.mxu0 0.0
      %542 = vmatpush2.msra.mxu0 0.0
      %543 = vmatprep.subr.mxu0 0.0
      %544 = vmatpush2.msra.mxu0 0.0
      %545 = vmatprep.subr.mxu0 0.0
      %546 = vmatpush2.msra.mxu0 0.0
      %547 = vmatprep.mubr.f32.mxu0 0.0
      %548 = vmatmul.mubr.f32.gmra.mxu0 %v481
      %v549 = vpop.f32.mrf.mxu0
      %v550 = vadd.f32 %v477, %v549
      %v551 = vpop.f32.mrf.mxu0
      %552 = vdwg.mxu0
      %v553 = vld [vmem:[%s5] sm:$0xff]
      %v554 = vld [vmem:[%s5 + $0x8] sm:$0xff]
      %v555 = vld [vmem:[%s5 + $0x10] sm:$0xff]
      %v556 = vld [vmem:[%s5 + $0x18] sm:$0xff]
      %558 = vrot.lane.b32.xlu0 %v550, 96
      %v559 = vpop.permute.xlu0 %558
      %vm560 = vcmask 130048
      %v561 = vsel %vm560, %v550, 0
      %v563 = vsel %vm560, %v559, 0
      %565 = vmatprep.subr.mxu0 0.0
      %566 = vmatpush1.xpose.msra.mxu0 0.0
      %567 = vmatprep.subr.mxu0 0.0
      %568 = vmatpush1.xpose.msra.mxu0 0.0
      %569 = vmatprep.subr.mxu0 0.0
      %570 = vmatpush1.xpose.msra.mxu0 0.0
      %571 = vmatprep.subr.mxu0 0.0
      %572 = vmatpush1.xpose.msra.mxu0 0.0
      %573 = vmatprep.subr.mxu0 0.0
      %574 = vmatpush1.xpose.msra.mxu0 0.0
      %575 = vmatprep.subr.mxu0 0.0
      %576 = vmatpush1.xpose.msra.mxu0 0.0
      %577 = vmatprep.subr.mxu0 0.0
      %578 = vmatpush1.xpose.msra.mxu0 0.0
      %579 = vmatprep.subr.mxu0 0.0
      %580 = vmatpush1.xpose.msra.mxu0 0.0
      %581 = vmatprep.subr.mxu0 0.0
      %582 = vmatpush1.xpose.msra.mxu0 0.0
      %583 = vmatprep.subr.mxu0 0.0
      %584 = vmatpush1.xpose.msra.mxu0 0.0
      %585 = vmatprep.subr.mxu0 0.0
      %586 = vmatpush1.xpose.msra.mxu0 0.0
      %587 = vmatprep.subr.mxu0 0.0
      %588 = vmatpush1.xpose.msra.mxu0 0.0
      %589 = vmatprep.subr.mxu0 0.0
      %590 = vmatpush1.xpose.msra.mxu0 0.0
      %591 = vmatprep.subr.mxu0 0.0
      %592 = vmatpush1.xpose.msra.mxu0 0.0
      %593 = vmatprep.subr.mxu0 0.0
      %594 = vmatpush1.xpose.msra.mxu0 0.0
      %595 = vmatprep.subr.mxu0 0.0
      %596 = vmatpush1.xpose.msra.mxu0 %v563
      %597 = vmatprep.subr.mxu0 0.0
      %598 = vmatpush2.xpose.msra.mxu0 0.0
      %599 = vmatprep.subr.mxu0 0.0
      %600 = vmatpush2.xpose.msra.mxu0 0.0
      %601 = vmatprep.subr.mxu0 0.0
      %602 = vmatpush2.xpose.msra.mxu0 0.0
      %603 = vmatprep.subr.mxu0 0.0
      %604 = vmatpush2.xpose.msra.mxu0 0.0
      %605 = vmatprep.subr.mxu0 0.0
      %606 = vmatpush2.xpose.msra.mxu0 0.0
      %607 = vmatprep.subr.mxu0 0.0
      %608 = vmatpush2.xpose.msra.mxu0 0.0
      %609 = vmatprep.subr.mxu0 0.0
      %610 = vmatpush2.xpose.msra.mxu0 0.0
      %611 = vmatprep.subr.mxu0 0.0
      %612 = vmatpush2.xpose.msra.mxu0 0.0
      %613 = vmatprep.subr.mxu0 0.0
      %614 = vmatpush2.xpose.msra.mxu0 0.0
      %615 = vmatprep.subr.mxu0 0.0
      %616 = vmatpush2.xpose.msra.mxu0 0.0
      %617 = vmatprep.subr.mxu0 0.0
      %618 = vmatpush2.xpose.msra.mxu0 0.0
      %619 = vmatprep.subr.mxu0 0.0
      %620 = vmatpush2.xpose.msra.mxu0 0.0
      %621 = vmatprep.subr.mxu0 0.0
      %622 = vmatpush2.xpose.msra.mxu0 0.0
      %623 = vmatprep.subr.mxu0 0.0
      %624 = vmatpush2.xpose.msra.mxu0 0.0
      %625 = vmatprep.subr.mxu0 0.0
      %626 = vmatpush2.xpose.msra.mxu0 0.0
      %627 = vmatprep.subr.mxu0 0.0
      %628 = vmatpush2.xpose.msra.mxu0 0.0
      %629 = vmatprep.mubr.f32.mxu0 0.0
      %630 = vmatmul.mubr.f32.gmra.mxu0 %v561
      %v631 = vpop.f32.mrf.mxu0
      %v632 = vadd.f32 0.0, %v631
      %v633 = vpop.f32.mrf.mxu0
      %634 = vdwg.mxu0
      %vm635 = vcmask 36864
      %v636 = vsel %vm635, %v632, -inf
      %637 = vmax.xlane.f32.xlu0 %v636
      %v638 = vpop.xlane.xlu0 %637
      %v639 = vsub.f32 %v632, %v638
      %v640 = vmul.f32 %v639, 1.442695
      %v641 = vpow.pop %v640
      %v642 = vsel %vm635, %v641, 0.0
      %643 = vadd.xlane.f32.xlu0 %v642
      %v644 = vpop.xlane.xlu0 %643
      %v645 = vrcp.pop %v644
      %v646 = vmul.f32 %v641, %v645
      %647 = vrot.lane.b32.xlu0 %v550, 64
      %v648 = vpop.permute.xlu0 %647
      %vm649 = vcmask 39936
      %v651 = vsel %vm649, %v646, 0
      %vm653 = vcmask 1044480
      %v654 = vsel %vm653, %v648, 0
      %656 = vmatprep.subr.mxu0 0.0
      %657 = vmatpush1.msra.mxu0 0.0
      %658 = vmatprep.subr.mxu0 0.0
      %659 = vmatpush1.msra.mxu0 0.0
      %660 = vmatprep.subr.mxu0 0.0
      %661 = vmatpush1.msra.mxu0 0.0
      %662 = vmatprep.subr.mxu0 0.0
      %663 = vmatpush1.msra.mxu0 0.0
      %664 = vmatprep.subr.mxu0 0.0
      %665 = vmatpush1.msra.mxu0 0.0
      %666 = vmatprep.subr.mxu0 0.0
      %667 = vmatpush1.msra.mxu0 0.0
      %668 = vmatprep.subr.mxu0 0.0
      %669 = vmatpush1.msra.mxu0 0.0
      %670 = vmatprep.subr.mxu0 0.0
      %671 = vmatpush1.msra.mxu0 0.0
      %672 = vmatprep.subr.mxu0 0.0
      %673 = vmatpush1.msra.mxu0 0.0
      %674 = vmatprep.subr.mxu0 0.0
      %675 = vmatpush1.msra.mxu0 0.0
      %676 = vmatprep.subr.mxu0 0.0
      %677 = vmatpush1.msra.mxu0 0.0
      %678 = vmatprep.subr.mxu0 0.0
      %679 = vmatpush1.msra.mxu0 0.0
      %680 = vmatprep.subr.mxu0 0.0
      %681 = vmatpush1.msra.mxu0 0.0
      %682 = vmatprep.subr.mxu0 0.0
      %683 = vmatpush1.msra.mxu0 0.0
      %684 = vmatprep.subr.mxu0 0.0
      %685 = vmatpush1.msra.mxu0 0.0
      %686 = vmatprep.subr.mxu0 0.0
      %687 = vmatpush1.msra.mxu0 %v654
      %688 = vmatprep.subr.mxu0 0.0
      %689 = vmatpush2.msra.mxu0 0.0
      %690 = vmatprep.subr.mxu0 0.0
      %691 = vmatpush2.msra.mxu0 0.0
      %692 = vmatprep.subr.mxu0 0.0
      %693 = vmatpush2.msra.mxu0 0.0
      %694 = vmatprep.subr.mxu0 0.0
      %695 = vmatpush2.msra.mxu0 0.0
      %696 = vmatprep.subr.mxu0 0.0
      %697 = vmatpush2.msra.mxu0 0.0
      %698 = vmatprep.subr.mxu0 0.0
      %699 = vmatpush2.msra.mxu0 0.0
      %700 = vmatprep.subr.mxu0 0.0
      %701 = vmatpush2.msra.mxu0 0.0
      %702 = vmatprep.subr.mxu0 0.0
      %703 = vmatpush2.msra.mxu0 0.0
      %704 = vmatprep.subr.mxu0 0.0
      %705 = vmatpush2.msra.mxu0 0.0
      %706 = vmatprep.subr.mxu0 0.0
      %707 = vmatpush2.msra.mxu0 0.0
      %708 = vmatprep.subr.mxu0 0.0
      %709 = vmatpush2.msra.mxu0 0.0
      %710 = vmatprep.subr.mxu0 0.0
      %711 = vmatpush2.msra.mxu0 0.0
      %712 = vmatprep.subr.mxu0 0.0
      %713 = vmatpush2.msra.mxu0 0.0
      %714 = vmatprep.subr.mxu0 0.0
      %715 = vmatpush2.msra.mxu0 0.0
      %716 = vmatprep.subr.mxu0 0.0
      %717 = vmatpush2.msra.mxu0 0.0
      %718 = vmatprep.subr.mxu0 0.0
      %719 = vmatpush2.msra.mxu0 0.0
      %720 = vmatprep.mubr.f32.mxu0 0.0
      %721 = vmatmul.mubr.f32.gmra.mxu0 %v651
      %v722 = vpop.f32.mrf.mxu0
      %v723 = vadd.f32 0.0, %v722
      %v724 = vpop.f32.mrf.mxu0
      %725 = vdwg.mxu0
      %726 = vrot.lane.b32.xlu0 %v550, 112
      %v727 = vpop.permute.xlu0 %726
      %728 = vrot.lane.b32.xlu0 %v550, 80
      %v729 = vpop.permute.xlu0 %728
      %v730 = vsel %vm560, %v727, 0
      %v732 = vsel %vm560, %v729, 0
      %734 = vmatprep.subr.mxu0 0.0
      %735 = vmatpush1.xpose.msra.mxu0 0.0
      %736 = vmatprep.subr.mxu0 0.0
      %737 = vmatpush1.xpose.msra.mxu0 0.0
      %738 = vmatprep.subr.mxu0 0.0
      %739 = vmatpush1.xpose.msra.mxu0 0.0
      %740 = vmatprep.subr.mxu0 0.0
      %741 = vmatpush1.xpose.msra.mxu0 0.0
      %742 = vmatprep.subr.mxu0 0.0
      %743 = vmatpush1.xpose.msra.mxu0 0.0
      %744 = vmatprep.subr.mxu0 0.0
      %745 = vmatpush1.xpose.msra.mxu0 0.0
      %746 = vmatprep.subr.mxu0 0.0
      %747 = vmatpush1.xpose.msra.mxu0 0.0
      %748 = vmatprep.subr.mxu0 0.0
      %749 = vmatpush1.xpose.msra.mxu0 0.0
      %750 = vmatprep.subr.mxu0 0.0
      %751 = vmatpush1.xpose.msra.mxu0 0.0
      %752 = vmatprep.subr.mxu0 0.0
      %753 = vmatpush1.xpose.msra.mxu0 0.0
      %754 = vmatprep.subr.mxu0 0.0
      %755 = vmatpush1.xpose.msra.mxu0 0.0
      %756 = vmatprep.subr.mxu0 0.0
      %757 = vmatpush1.xpose.msra.mxu0 0.0
      %758 = vmatprep.subr.mxu0 0.0
      %759 = vmatpush1.xpose.msra.mxu0 0.0
      %760 = vmatprep.subr.mxu0 0.0
      %761 = vmatpush1.xpose.msra.mxu0 0.0
      %762 = vmatprep.subr.mxu0 0.0
      %763 = vmatpush1.xpose.msra.mxu0 0.0
      %764 = vmatprep.subr.mxu0 0.0
      %765 = vmatpush1.xpose.msra.mxu0 %v732
      %766 = vmatprep.subr.mxu0 0.0
      %767 = vmatpush2.xpose.msra.mxu0 0.0
      %768 = vmatprep.subr.mxu0 0.0
      %769 = vmatpush2.xpose.msra.mxu0 0.0
      %770 = vmatprep.subr.mxu0 0.0
      %771 = vmatpush2.xpose.msra.mxu0 0.0
      %772 = vmatprep.subr.mxu0 0.0
      %773 = vmatpush2.xpose.msra.mxu0 0.0
      %774 = vmatprep.subr.mxu0 0.0
      %775 = vmatpush2.xpose.msra.mxu0 0.0
      %776 = vmatprep.subr.mxu0 0.0
      %777 = vmatpush2.xpose.msra.mxu0 0.0
      %778 = vmatprep.subr.mxu0 0.0
      %779 = vmatpush2.xpose.msra.mxu0 0.0
      %780 = vmatprep.subr.mxu0 0.0
      %781 = vmatpush2.xpose.msra.mxu0 0.0
      %782 = vmatprep.subr.mxu0 0.0
      %783 = vmatpush2.xpose.msra.mxu0 0.0
      %784 = vmatprep.subr.mxu0 0.0
      %785 = vmatpush2.xpose.msra.mxu0 0.0
      %786 = vmatprep.subr.mxu0 0.0
      %787 = vmatpush2.xpose.msra.mxu0 0.0
      %788 = vmatprep.subr.mxu0 0.0
      %789 = vmatpush2.xpose.msra.mxu0 0.0
      %790 = vmatprep.subr.mxu0 0.0
      %791 = vmatpush2.xpose.msra.mxu0 0.0
      %792 = vmatprep.subr.mxu0 0.0
      %793 = vmatpush2.xpose.msra.mxu0 0.0
      %794 = vmatprep.subr.mxu0 0.0
      %795 = vmatpush2.xpose.msra.mxu0 0.0
      %796 = vmatprep.subr.mxu0 0.0
      %797 = vmatpush2.xpose.msra.mxu0 0.0
      %798 = vmatprep.mubr.f32.mxu0 0.0
      %799 = vmatmul.mubr.f32.gmra.mxu0 %v730
      %v800 = vpop.f32.mrf.mxu0
      %v801 = vadd.f32 0.0, %v800
      %v802 = vpop.f32.mrf.mxu0
      %803 = vdwg.mxu0
      %v804 = vsel %vm635, %v801, -inf
      %805 = vmax.xlane.f32.xlu0 %v804
      %v806 = vpop.xlane.xlu0 %805
      %v807 = vsub.f32 %v801, %v806
      %v808 = vmul.f32 %v807, 1.442695
      %v809 = vpow.pop %v808
      %v810 = vsel %vm635, %v809, 0.0
      %811 = vadd.xlane.f32.xlu0 %v810
      %v812 = vpop.xlane.xlu0 %811
      %v813 = vrcp.pop %v812
      %v814 = vmul.f32 %v809, %v813
      %815 = vrot.lane.b32.xlu0 %v550, 48
      %v816 = vpop.permute.xlu0 %815
      %v818 = vsel %vm649, %v814, 0
      %v820 = vsel %vm653, %v816, 0
      %822 = vmatprep.subr.mxu0 0.0
      %823 = vmatpush1.msra.mxu0 0.0
      %824 = vmatprep.subr.mxu0 0.0
      %825 = vmatpush1.msra.mxu0 0.0
      %826 = vmatprep.subr.mxu0 0.0
      %827 = vmatpush1.msra.mxu0 0.0
      %828 = vmatprep.subr.mxu0 0.0
      %829 = vmatpush1.msra.mxu0 0.0
      %830 = vmatprep.subr.mxu0 0.0
      %831 = vmatpush1.msra.mxu0 0.0
      %832 = vmatprep.subr.mxu0 0.0
      %833 = vmatpush1.msra.mxu0 0.0
      %834 = vmatprep.subr.mxu0 0.0
      %835 = vmatpush1.msra.mxu0 0.0
      %836 = vmatprep.subr.mxu0 0.0
      %837 = vmatpush1.msra.mxu0 0.0
      %838 = vmatprep.subr.mxu0 0.0
      %839 = vmatpush1.msra.mxu0 0.0
      %840 = vmatprep.subr.mxu0 0.0
      %841 = vmatpush1.msra.mxu0 0.0
      %842 = vmatprep.subr.mxu0 0.0
      %843 = vmatpush1.msra.mxu0 0.0
      %844 = vmatprep.subr.mxu0 0.0
      %845 = vmatpush1.msra.mxu0 0.0
      %846 = vmatprep.subr.mxu0 0.0
      %847 = vmatpush1.msra.mxu0 0.0
      %848 = vmatprep.subr.mxu0 0.0
      %849 = vmatpush1.msra.mxu0 0.0
      %850 = vmatprep.subr.mxu0 0.0
      %851 = vmatpush1.msra.mxu0 0.0
      %852 = vmatprep.subr.mxu0 0.0
      %853 = vmatpush1.msra.mxu0 %v820
      %854 = vmatprep.subr.mxu0 0.0
      %855 = vmatpush2.msra.mxu0 0.0
      %856 = vmatprep.subr.mxu0 0.0
      %857 = vmatpush2.msra.mxu0 0.0
      %858 = vmatprep.subr.mxu0 0.0
      %859 = vmatpush2.msra.mxu0 0.0
      %860 = vmatprep.subr.mxu0 0.0
      %861 = vmatpush2.msra.mxu0 0.0
      %862 = vmatprep.subr.mxu0 0.0
      %863 = vmatpush2.msra.mxu0 0.0
      %864 = vmatprep.subr.mxu0 0.0
      %865 = vmatpush2.msra.mxu0 0.0
      %866 = vmatprep.subr.mxu0 0.0
      %867 = vmatpush2.msra.mxu0 0.0
      %868 = vmatprep.subr.mxu0 0.0
      %869 = vmatpush2.msra.mxu0 0.0
      %870 = vmatprep.subr.mxu0 0.0
      %871 = vmatpush2.msra.mxu0 0.0
      %872 = vmatprep.subr.mxu0 0.0
      %873 = vmatpush2.msra.mxu0 0.0
      %874 = vmatprep.subr.mxu0 0.0
      %875 = vmatpush2.msra.mxu0 0.0
      %876 = vmatprep.subr.mxu0 0.0
      %877 = vmatpush2.msra.mxu0 0.0
      %878 = vmatprep.subr.mxu0 0.0
      %879 = vmatpush2.msra.mxu0 0.0
      %880 = vmatprep.subr.mxu0 0.0
      %881 = vmatpush2.msra.mxu0 0.0
      %882 = vmatprep.subr.mxu0 0.0
      %883 = vmatpush2.msra.mxu0 0.0
      %884 = vmatprep.subr.mxu0 0.0
      %885 = vmatpush2.msra.mxu0 0.0
      %886 = vmatprep.mubr.f32.mxu0 0.0
      %887 = vmatmul.mubr.f32.gmra.mxu0 %v818
      %v888 = vpop.f32.mrf.mxu0
      %v889 = vadd.f32 0.0, %v888
      %v890 = vpop.f32.mrf.mxu0
      %891 = vdwg.mxu0
      %v893 = vsel %vm560, %v889, 0
      %895 = vmatprep.subr.mxu0 0.0
      %896 = vmatpush1.msra.mxu0 0.0
      %897 = vmatprep.subr.mxu0 0.0
      %898 = vmatpush1.msra.mxu0 0.0
      %899 = vmatprep.subr.mxu0 0.0
      %900 = vmatpush1.msra.mxu0 0.0
      %901 = vmatprep.subr.mxu0 0.0
      %902 = vmatpush1.msra.mxu0 0.0
      %903 = vmatprep.subr.mxu0 0.0
      %904 = vmatpush1.msra.mxu0 0.0
      %905 = vmatprep.subr.mxu0 0.0
      %906 = vmatpush1.msra.mxu0 0.0
      %907 = vmatprep.subr.mxu0 0.0
      %908 = vmatpush1.msra.mxu0 0.0
      %909 = vmatprep.subr.mxu0 0.0
      %910 = vmatpush1.msra.mxu0 0.0
      %911 = vmatprep.subr.mxu0 0.0
      %912 = vmatpush1.msra.mxu0 0.0
      %913 = vmatprep.subr.mxu0 0.0
      %914 = vmatpush1.msra.mxu0 0.0
      %915 = vmatprep.subr.mxu0 0.0
      %916 = vmatpush1.msra.mxu0 0.0
      %917 = vmatprep.subr.mxu0 0.0
      %918 = vmatpush1.msra.mxu0 0.0
      %919 = vmatprep.subr.mxu0 0.0
      %920 = vmatpush1.msra.mxu0 0.0
      %921 = vmatprep.subr.mxu0 0.0
      %922 = vmatpush1.msra.mxu0 0.0
      %923 = vmatprep.subr.mxu0 0.0
      %924 = vmatpush1.msra.mxu0 %v556
      %925 = vmatprep.subr.mxu0 0.0
      %926 = vmatpush1.msra.mxu0 %v555
      %927 = vmatprep.subr.mxu0 0.0
      %928 = vmatpush2.msra.mxu0 0.0
      %929 = vmatprep.subr.mxu0 0.0
      %930 = vmatpush2.msra.mxu0 0.0
      %931 = vmatprep.subr.mxu0 0.0
      %932 = vmatpush2.msra.mxu0 0.0
      %933 = vmatprep.subr.mxu0 0.0
      %934 = vmatpush2.msra.mxu0 0.0
      %935 = vmatprep.subr.mxu0 0.0
      %936 = vmatpush2.msra.mxu0 0.0
      %937 = vmatprep.subr.mxu0 0.0
      %938 = vmatpush2.msra.mxu0 0.0
      %939 = vmatprep.subr.mxu0 0.0
      %940 = vmatpush2.msra.mxu0 0.0
      %941 = vmatprep.subr.mxu0 0.0
      %942 = vmatpush2.msra.mxu0 0.0
      %943 = vmatprep.subr.mxu0 0.0
      %944 = vmatpush2.msra.mxu0 0.0
      %945 = vmatprep.subr.mxu0 0.0
      %946 = vmatpush2.msra.mxu0 0.0
      %947 = vmatprep.subr.mxu0 0.0
      %948 = vmatpush2.msra.mxu0 0.0
      %949 = vmatprep.subr.mxu0 0.0
      %950 = vmatpush2.msra.mxu0 0.0
      %951 = vmatprep.subr.mxu0 0.0
      %952 = vmatpush2.msra.mxu0 0.0
      %953 = vmatprep.subr.mxu0 0.0
      %954 = vmatpush2.msra.mxu0 0.0
      %955 = vmatprep.subr.mxu0 0.0
      %956 = vmatpush2.msra.mxu0 0.0
      %957 = vmatprep.subr.mxu0 0.0
      %958 = vmatpush2.msra.mxu0 0.0
      %959 = vmatprep.mubr.f32.mxu0 0.0
      %960 = vmatmul.mubr.f32.gmra.mxu0 %v893
      %v961 = vpop.f32.mrf.mxu0
      %v962 = vadd.f32 0.0, %v961
      %v963 = vpop.f32.mrf.mxu0
      %964 = vdwg.mxu0
      %v966 = vsel %vm560, %v723, 0
      %968 = vmatprep.subr.mxu0 0.0
      %969 = vmatpush1.msra.mxu0 0.0
      %970 = vmatprep.subr.mxu0 0.0
      %971 = vmatpush1.msra.mxu0 0.0
      %972 = vmatprep.subr.mxu0 0.0
      %973 = vmatpush1.msra.mxu0 0.0
      %974 = vmatprep.subr.mxu0 0.0
      %975 = vmatpush1.msra.mxu0 0.0
      %976 = vmatprep.subr.mxu0 0.0
      %977 = vmatpush1.msra.mxu0 0.0
      %978 = vmatprep.subr.mxu0 0.0
      %979 = vmatpush1.msra.mxu0 0.0
      %980 = vmatprep.subr.mxu0 0.0
      %981 = vmatpush1.msra.mxu0 0.0
      %982 = vmatprep.subr.mxu0 0.0
      %983 = vmatpush1.msra.mxu0 0.0
      %984 = vmatprep.subr.mxu0 0.0
      %985 = vmatpush1.msra.mxu0 0.0
      %986 = vmatprep.subr.mxu0 0.0
      %987 = vmatpush1.msra.mxu0 0.0
      %988 = vmatprep.subr.mxu0 0.0
      %989 = vmatpush1.msra.mxu0 0.0
      %990 = vmatprep.subr.mxu0 0.0
      %991 = vmatpush1.msra.mxu0 0.0
      %992 = vmatprep.subr.mxu0 0.0
      %993 = vmatpush1.msra.mxu0 0.0
      %994 = vmatprep.subr.mxu0 0.0
      %995 = vmatpush1.msra.mxu0 0.0
      %996 = vmatprep.subr.mxu0 0.0
      %997 = vmatpush1.msra.mxu0 %v554
      %998 = vmatprep.subr.mxu0 0.0
      %999 = vmatpush1.msra.mxu0 %v553
      %1000 = vmatprep.subr.mxu0 0.0
      %1001 = vmatpush2.msra.mxu0 0.0
      %1002 = vmatprep.subr.mxu0 0.0
      %1003 = vmatpush2.msra.mxu0 0.0
      %1004 = vmatprep.subr.mxu0 0.0
      %1005 = vmatpush2.msra.mxu0 0.0
      %1006 = vmatprep.subr.mxu0 0.0
      %1007 = vmatpush2.msra.mxu0 0.0
      %1008 = vmatprep.subr.mxu0 0.0
      %1009 = vmatpush2.msra.mxu0 0.0
      %1010 = vmatprep.subr.mxu0 0.0
      %1011 = vmatpush2.msra.mxu0 0.0
      %1012 = vmatprep.subr.mxu0 0.0
      %1013 = vmatpush2.msra.mxu0 0.0
      %1014 = vmatprep.subr.mxu0 0.0
      %1015 = vmatpush2.msra.mxu0 0.0
      %1016 = vmatprep.subr.mxu0 0.0
      %1017 = vmatpush2.msra.mxu0 0.0
      %1018 = vmatprep.subr.mxu0 0.0
      %1019 = vmatpush2.msra.mxu0 0.0
      %1020 = vmatprep.subr.mxu0 0.0
      %1021 = vmatpush2.msra.mxu0 0.0
      %1022 = vmatprep.subr.mxu0 0.0
      %1023 = vmatpush2.msra.mxu0 0.0
      %1024 = vmatprep.subr.mxu0 0.0
      %1025 = vmatpush2.msra.mxu0 0.0
      %1026 = vmatprep.subr.mxu0 0.0
      %1027 = vmatpush2.msra.mxu0 0.0
      %1028 = vmatprep.subr.mxu0 0.0
      %1029 = vmatpush2.msra.mxu0 0.0
      %1030 = vmatprep.subr.mxu0 0.0
      %1031 = vmatpush2.msra.mxu0 0.0
      %1032 = vmatprep.mubr.f32.mxu0 0.0
      %1033 = vmatmul.mubr.f32.gmra.mxu0 %v966
      %v1034 = vpop.f32.mrf.mxu0
      %v1035 = vadd.f32 %v962, %v1034
      %v1036 = vpop.f32.mrf.mxu0
      %1037 = vdwg.mxu0
      %v1038 = vadd.f32 %v436, %v1035
      %v1039 = vld [vmem:[%s6] sm:$0x1]
      %v1041 = vlaneseq
      %v1042 = vshrl.u32 %v1041, 7
      %v1043 = vsub.s32 0, %v1042
      %v1044 = vrot.slane %v1039, %v1043
      %v1046 = vadd.f32 %v1038, %v1044
      %v1047 = vld [vmem:[%s7] sm:$0x1]
      %v1048 = vld [vmem:[%s8] sm:$0x1]
      %v1049 = vsel %vm439, %v1046, 0.0
      %1050 = vadd.xlane.f32.xlu0 %v1049
      %v1051 = vpop.xlane.xlu0 %1050
      %v1052 = vmul.f32 %v1051, %v443
      %v1053 = vsub.f32 %v1046, %v1052
      %v1054 = vmul.f32 %v1053, %v1053
      %v1055 = vsel %vm439, %v1054, 0.0
      %1056 = vadd.xlane.f32.xlu0 %v1055
      %v1057 = vpop.xlane.xlu0 %1056
      %v1058 = vmul.f32 %v1057, %v443
      %v1059 = vadd.f32 %v1058, 1e-05
      %v1060 = vrsqrt.pop %v1059
      %v1061 = vmul.f32 %v1053, %v1060
      %v1063 = vlaneseq
      %v1064 = vshrl.u32 %v1063, 7
      %v1065 = vsub.s32 0, %v1064
      %v1066 = vrot.slane %v1047, %v1065
      %v1068 = vmul.f32 %v1061, %v1066
      %v1070 = vlaneseq
      %v1071 = vshrl.u32 %v1070, 7
      %v1072 = vsub.s32 0, %v1071
      %v1073 = vrot.slane %v1048, %v1072
      %v1075 = vadd.f32 %v1068, %v1073
      %v1076 = vld [vmem:[%s9] sm:$0xff]
      %v1077 = vld [vmem:[%s9 + $0x8] sm:$0xff]
      %v1078 = vld [vmem:[%s9 + $0x10] sm:$0xff]
      %v1079 = vld [vmem:[%s9 + $0x18] sm:$0xff]
      %v1080 = vld [vmem:[%s10] sm:$0x1]
      %v1082 = vlaneseq
      %v1083 = vshrl.u32 %v1082, 7
      %v1084 = vsub.s32 0, %v1083
      %v1085 = vrot.slane %v1080, %v1084
      %v1088 = vsel %vm479, %v1075, 0
      %1090 = vmatprep.subr.mxu0 0.0
      %1091 = vmatpush1.msra.mxu0 0.0
      %1092 = vmatprep.subr.mxu0 0.0
      %1093 = vmatpush1.msra.mxu0 0.0
      %1094 = vmatprep.subr.mxu0 0.0
      %1095 = vmatpush1.msra.mxu0 0.0
      %1096 = vmatprep.subr.mxu0 0.0
      %1097 = vmatpush1.msra.mxu0 0.0
      %1098 = vmatprep.subr.mxu0 0.0
      %1099 = vmatpush1.msra.mxu0 0.0
      %1100 = vmatprep.subr.mxu0 0.0
      %1101 = vmatpush1.msra.mxu0 0.0
      %1102 = vmatprep.subr.mxu0 0.0
      %1103 = vmatpush1.msra.mxu0 0.0
      %1104 = vmatprep.subr.mxu0 0.0
      %1105 = vmatpush1.msra.mxu0 0.0
      %1106 = vmatprep.subr.mxu0 0.0
      %1107 = vmatpush1.msra.mxu0 0.0
      %1108 = vmatprep.subr.mxu0 0.0
      %1109 = vmatpush1.msra.mxu0 0.0
      %1110 = vmatprep.subr.mxu0 0.0
      %1111 = vmatpush1.msra.mxu0 0.0
      %1112 = vmatprep.subr.mxu0 0.0
      %1113 = vmatpush1.msra.mxu0 0.0
      %1114 = vmatprep.subr.mxu0 0.0
      %1115 = vmatpush1.msra.mxu0 %v1079
      %1116 = vmatprep.subr.mxu0 0.0
      %1117 = vmatpush1.msra.mxu0 %v1078
      %1118 = vmatprep.subr.mxu0 0.0
      %1119 = vmatpush1.msra.mxu0 %v1077
      %1120 = vmatprep.subr.mxu0 0.0
      %1121 = vmatpush1.msra.mxu0 %v1076
      %1122 = vmatprep.subr.mxu0 0.0
      %1123 = vmatpush2.msra.mxu0 0.0
      %1124 = vmatprep.subr.mxu0 0.0
      %1125 = vmatpush2.msra.mxu0 0.0
      %1126 = vmatprep.subr.mxu0 0.0
      %1127 = vmatpush2.msra.mxu0 0.0
      %1128 = vmatprep.subr.mxu0 0.0
      %1129 = vmatpush2.msra.mxu0 0.0
      %1130 = vmatprep.subr.mxu0 0.0
      %1131 = vmatpush2.msra.mxu0 0.0
      %1132 = vmatprep.subr.mxu0 0.0
      %1133 = vmatpush2.msra.mxu0 0.0
      %1134 = vmatprep.subr.mxu0 0.0
      %1135 = vmatpush2.msra.mxu0 0.0
      %1136 = vmatprep.subr.mxu0 0.0
      %1137 = vmatpush2.msra.mxu0 0.0
      %1138 = vmatprep.subr.mxu0 0.0
      %1139 = vmatpush2.msra.mxu0 0.0
      %1140 = vmatprep.subr.mxu0 0.0
      %1141 = vmatpush2.msra.mxu0 0.0
      %1142 = vmatprep.subr.mxu0 0.0
      %1143 = vmatpush2.msra.mxu0 0.0
      %1144 = vmatprep.subr.mxu0 0.0
      %1145 = vmatpush2.msra.mxu0 0.0
      %1146 = vmatprep.subr.mxu0 0.0
      %1147 = vmatpush2.msra.mxu0 0.0
      %1148 = vmatprep.subr.mxu0 0.0
      %1149 = vmatpush2.msra.mxu0 0.0
      %1150 = vmatprep.subr.mxu0 0.0
      %1151 = vmatpush2.msra.mxu0 0.0
      %1152 = vmatprep.subr.mxu0 0.0
      %1153 = vmatpush2.msra.mxu0 0.0
      %1154 = vmatprep.mubr.f32.mxu0 0.0
      %1155 = vmatmul.mubr.f32.gmra.mxu0 %v1088
      %v1156 = vpop.f32.mrf.mxu0
      %v1157 = vadd.f32 %v1085, %v1156
      %v1158 = vpop.f32.mrf.mxu0
      %1159 = vdwg.mxu0
      %v1160 = vmul.f32 %v1157, 0.5
      %v1161 = vmul.f32 %v1157, 0.044715
      %v1162 = vmul.f32 %v1161, %v1157
      %v1163 = vmul.f32 %v1162, %v1157
      %v1164 = vadd.f32 %v1157, %v1163
      %v1165 = vmul.f32 %v1164, 0.7978846
      %v1166 = vtanh.pop %v1165
      %v1167 = vadd.f32 %v1166, 1.0
      %v1168 = vmul.f32 %v1160, %v1167
      %v1169 = vld [vmem:[%s11] sm:$0xff]
      %v1170 = vld [vmem:[%s11 + $0x8] sm:$0xff]
      %v1171 = vld [vmem:[%s11 + $0x10] sm:$0xff]
      %v1172 = vld [vmem:[%s11 + $0x18] sm:$0xff]
      %v1173 = vld [vmem:[%s11 + $0x20] sm:$0xff]
      %v1174 = vld [vmem:[%s11 + $0x28] sm:$0xff]
      %v1175 = vld [vmem:[%s11 + $0x30] sm:$0xff]
      %v1176 = vld [vmem:[%s11 + $0x38] sm:$0xff]
      %v1177 = vld [vmem:[%s11 + $0x40] sm:$0xff]
      %v1178 = vld [vmem:[%s11 + $0x48] sm:$0xff]
      %v1179 = vld [vmem:[%s11 + $0x50] sm:$0xff]
      %v1180 = vld [vmem:[%s11 + $0x58] sm:$0xff]
      %v1181 = vld [vmem:[%s11 + $0x60] sm:$0xff]
      %v1182 = vld [vmem:[%s11 + $0x68] sm:$0xff]
      %v1183 = vld [vmem:[%s11 + $0x70] sm:$0xff]
      %v1184 = vld [vmem:[%s11 + $0x78] sm:$0xff]
      %1185 = vmatprep.subr.mxu0 0.0
      %1186 = vmatpush1.msra.mxu0 %v1184
      %1187 = vmatprep.subr.mxu0 0.0
      %1188 = vmatpush1.msra.mxu0 %v1183
      %1189 = vmatprep.subr.mxu0 0.0
      %1190 = vmatpush1.msra.mxu0 %v1182
      %1191 = vmatprep.subr.mxu0 0.0
      %1192 = vmatpush1.msra.mxu0 %v1181
      %1193 = vmatprep.subr.mxu0 0.0
      %1194 = vmatpush1.msra.mxu0 %v1180
      %1195 = vmatprep.subr.mxu0 0.0
      %1196 = vmatpush1.msra.mxu0 %v1179
      %1197 = vmatprep.subr.mxu0 0.0
      %1198 = vmatpush1.msra.mxu0 %v1178
      %1199 = vmatprep.subr.mxu0 0.0
      %1200 = vmatpush1.msra.mxu0 %v1177
      %1201 = vmatprep.subr.mxu0 0.0
      %1202 = vmatpush1.msra.mxu0 %v1176
      %1203 = vmatprep.subr.mxu0 0.0
      %1204 = vmatpush1.msra.mxu0 %v1175
      %1205 = vmatprep.subr.mxu0 0.0
      %1206 = vmatpush1.msra.mxu0 %v1174
      %1207 = vmatprep.subr.mxu0 0.0
      %1208 = vmatpush1.msra.mxu0 %v1173
      %1209 = vmatprep.subr.mxu0 0.0
      %1210 = vmatpush1.msra.mxu0 %v1172
      %1211 = vmatprep.subr.mxu0 0.0
      %1212 = vmatpush1.msra.mxu0 %v1171
      %1213 = vmatprep.subr.mxu0 0.0
      %1214 = vmatpush1.msra.mxu0 %v1170
      %1215 = vmatprep.subr.mxu0 0.0
      %1216 = vmatpush1.msra.mxu0 %v1169
      %1217 = vmatprep.subr.mxu0 0.0
      %1218 = vmatpush2.msra.mxu0 0.0
      %1219 = vmatprep.subr.mxu0 0.0
      %1220 = vmatpush2.msra.mxu0 0.0
      %1221 = vmatprep.subr.mxu0 0.0
      %1222 = vmatpush2.msra.mxu0 0.0
      %1223 = vmatprep.subr.mxu0 0.0
      %1224 = vmatpush2.msra.mxu0 0.0
      %1225 = vmatprep.subr.mxu0 0.0
      %1226 = vmatpush2.msra.mxu0 0.0
      %1227 = vmatprep.subr.mxu0 0.0
      %1228 = vmatpush2.msra.mxu0 0.0
      %1229 = vmatprep.subr.mxu0 0.0
      %1230 = vmatpush2.msra.mxu0 0.0
      %1231 = vmatprep.subr.mxu0 0.0
      %1232 = vmatpush2.msra.mxu0 0.0
      %1233 = vmatprep.subr.mxu0 0.0
      %1234 = vmatpush2.msra.mxu0 0.0
      %1235 = vmatprep.subr.mxu0 0.0
      %1236 = vmatpush2.msra.mxu0 0.0
      %1237 = vmatprep.subr.mxu0 0.0
      %1238 = vmatpush2.msra.mxu0 0.0
      %1239 = vmatprep.subr.mxu0 0.0
      %1240 = vmatpush2.msra.mxu0 0.0
      %1241 = vmatprep.subr.mxu0 0.0
      %1242 = vmatpush2.msra.mxu0 0.0
      %1243 = vmatprep.subr.mxu0 0.0
      %1244 = vmatpush2.msra.mxu0 0.0
      %1245 = vmatprep.subr.mxu0 0.0
      %1246 = vmatpush2.msra.mxu0 0.0
      %1247 = vmatprep.subr.mxu0 0.0
      %1248 = vmatpush2.msra.mxu0 0.0
      %1249 = vmatprep.mubr.f32.mxu0 0.0
      %1250 = vmatmul.mubr.f32.gmra.mxu0 %v1168
      %v1251 = vpop.f32.mrf.mxu0
      %v1252 = vadd.f32 0.0, %v1251
      %v1253 = vpop.f32.mrf.mxu0
      %1254 = vdwg.mxu0
      %v1255 = vadd.f32 %v1046, %v1252
      %v1256 = vld [vmem:[%s12] sm:$0x1]
      %v1258 = vlaneseq
      %v1259 = vshrl.u32 %v1258, 7
      %v1260 = vsub.s32 0, %v1259
      %v1261 = vrot.slane %v1256, %v1260
      %v1263 = vadd.f32 %v1255, %v1261
      %1264 = vst.msk [vmem:[%s435] sm:$0x1f] %vm439, %v1263
      %p1265 = scmp.lt.s32.totalorder %s24, 1
      %s1266 = scalar_select %p1265, %s24, 1
      %s1267 = smul.addr %s1266, 8
      %s1268 = scalar_lea.vmem %s13, %s1267
      // Predicated region
      $region73: #{_lambda_.5} parent=71 // pred_check
        %p1269 = pneg %p320
      $region74: #{_lambda_.5} parent=71 // pred_check_branch
        %1271 = sbr.rel (%p1269) target = $region76
      $region75: #{_lambda_.5} parent=71 // pred_region
        _
      $region76: #{_lambda_.5} parent=71 // pred_fallthru
        _
    $region72: #{_lambda_.5} parent=5 // pred_fallthru
      _
    %p1272 = scmp.le.s32.totalorder 2, %s19
    // Predicated region
    $region77: #{_lambda_.5} parent=5 // pred_check
      %p1273 = pneg %p1272
    $region78: #{_lambda_.5} parent=5 // pred_check_branch
      %1275 = sbr.rel (%p1273) target = $region80
    $region79: #{_lambda_.5} parent=5 // pred_region
      %s1276 = ssub.s32 %s19, 2
      // Predicated region
      $region81: #{_lambda_.5} parent=79 // pred_check
        %p1277 = pneg %p326
      $region82: #{_lambda_.5} parent=79 // pred_check_branch
        %1279 = sbr.rel (%p1277) target = $region84
      $region83: #{_lambda_.5} parent=79 // pred_region
        %p1280 = scmp.lt.s32.totalorder %s25, 1
        %s1281 = scalar_select %p1280, %s25, 1
        %s1282 = smul.addr %s1281, 8
        %s1283 = scalar_lea.vmem %s13, %s1282
      $region84: #{_lambda_.5} parent=79 // pred_fallthru
        _
    $region80: #{_lambda_.5} parent=5 // pred_fallthru
      _
  $region6: #{_lambda_.5} parent=0 // loop_footer
    %s23 = sadd.s32 1, %s19
  $region7: #{_lambda_.5} parent=0 // loop_footer_branch
    %18 = sbr.rel target = $region3
  $region8: #{_lambda_.5} parent=0 // loop_exit
    _

</llo_original>
